<compile_context>
chip_gen: v7x
topology: tpu7x:2x2x1
jax: 0.10.0
libtpu: 0.0.40
codegen_flags: <defaults>
</compile_context>

<pallas_src>
import jax
import jax.numpy as jnp
from jax.experimental import pallas as pl
from jax.experimental.pallas import tpu as pltpu

BN_EPS = 1e-5
TB = 128        # batch tile (multiple of 128 -> MXU-friendly M)
IN_PAD = 896    # 784 padded to 7*128 -> dense lane tiling for the layer-1 K sweep
OUT_PAD = 128   # logits padded 10 -> 128 -> unmasked lane-dense stores


def mlp_kernel(x_ref, w1_ref, b1_ref, w2_ref, b2_ref, w3_ref, b3_ref,
               w4_ref, b4_ref, o_ref):
    # BN is already folded into (w, b) in the wrapper; dropout is identity (eval).
    h = jnp.dot(x_ref[...], w1_ref[...], preferred_element_type=jnp.float32)
    h = jnp.maximum(h + b1_ref[...], 0.0)
    h = jnp.dot(h, w2_ref[...], preferred_element_type=jnp.float32)
    h = jnp.maximum(h + b2_ref[...], 0.0)
    h = jnp.dot(h, w3_ref[...], preferred_element_type=jnp.float32)
    h = jnp.maximum(h + b3_ref[...], 0.0)
    o_ref[...] = (jnp.dot(h, w4_ref[...], preferred_element_type=jnp.float32)
                  + b4_ref[...]).astype(o_ref.dtype)


def _fold_bn(w, b, gamma, beta, mean, var):
    """Fold eval-mode BatchNorm1d into the preceding Linear.

    w: [out, in] (PyTorch layout), b/gamma/beta/mean/var: [out].
    Returns w': [in, out], b': [1, out] such that
      bn(x @ w.T + b) == x @ w' + b'.
    """
    scale = gamma * jax.lax.rsqrt(var + BN_EPS)        # [out]
    w_f = (w * scale[:, None]).T                       # [in, out]
    b_f = (b - mean) * scale + beta                    # [out]
    return w_f, b_f.reshape(1, -1)


@jax.jit
def fully_connected_mnist_forward(x_nchw, params):
    (w1, b1, g1, be1, m1, v1,
     w2, b2, g2, be2, m2, v2,
     w3, b3, g3, be3, m3, v3,
     w4, b4) = params

    B = x_nchw.shape[0]
    x = x_nchw.reshape(B, -1).astype(jnp.float32)                 # [B, 784]
    x = jnp.pad(x, ((0, 0), (0, IN_PAD - x.shape[1])))            # [B, 896]
    B_pad = ((B + TB - 1) // TB) * TB
    x = jnp.pad(x, ((0, B_pad - B), (0, 0)))                      # [B_pad, 896]

    # Fold BN + bias into the weights (eval-mode BN is a pure affine transform).
    w1f, b1f = _fold_bn(w1, b1, g1, be1, m1, v1)                  # [784,256], [1,256]
    w2f, b2f = _fold_bn(w2, b2, g2, be2, m2, v2)                  # [256,128], [1,128]
    w3f, b3f = _fold_bn(w3, b3, g3, be3, m3, v3)                  # [128, 64], [1, 64]
    w4f = w4.T                                                    # [64, 10]
    b4f = b4.reshape(1, -1)                                       # [1, 10]

    # Pad layer-1 input dim (zero rows: padded x columns are zero anyway) and
    # layer-4 output dim (zero lanes, sliced off after the call).
    w1f = jnp.pad(w1f, ((0, IN_PAD - w1f.shape[0]), (0, 0)))      # [896, 256]
    w4f = jnp.pad(w4f, ((0, 0), (0, OUT_PAD - w4f.shape[1])))     # [64, 128]
    b4f = jnp.pad(b4f, ((0, 0), (0, OUT_PAD - b4f.shape[1])))     # [1, 128]

    weight_args = [w1f, b1f, w2f, b2f, w3f, b3f, w4f, b4f]

    def pinned(a):
        # Full-array block, constant index_map -> stays resident across steps.
        return pl.BlockSpec(a.shape, lambda i: (0, 0))

    out = pl.pallas_call(
        mlp_kernel,
        out_shape=jax.ShapeDtypeStruct((B_pad, OUT_PAD), jnp.float32),
        grid=(B_pad // TB,),
        in_specs=[pl.BlockSpec((TB, IN_PAD), lambda i: (i, 0))]
                 + [pinned(a) for a in weight_args],
        out_specs=pl.BlockSpec((TB, OUT_PAD), lambda i: (i, 0)),
        compiler_params=pltpu.CompilerParams(
            dimension_semantics=("parallel",)),
    )(x, *weight_args)

    return out[:B, :10]


def init_params(key):
    """Deterministic parameter init matching the PyTorch module's shapes.

    Linear weights are [out, in] and biases [out] (PyTorch convention);
    BN params gamma=1, beta=0, running_mean=0, running_var=1 (fresh-module
    defaults), each shaped [out].
    """
    dims = [(784, 256), (256, 128), (128, 64), (64, 10)]
    params = []
    keys = jax.random.split(key, 2 * len(dims))
    for i, (din, dout) in enumerate(dims):
        bound = 1.0 / (din ** 0.5)
        w = jax.random.uniform(keys[2 * i], (dout, din), jnp.float32, -bound, bound)
        b = jax.random.uniform(keys[2 * i + 1], (dout,), jnp.float32, -bound, bound)
        params += [w, b]
        if i < 3:  # BN after the first three layers
            params += [jnp.ones((dout,), jnp.float32),    # gamma
                       jnp.zeros((dout,), jnp.float32),   # beta
                       jnp.zeros((dout,), jnp.float32),   # running_mean
                       jnp.ones((dout,), jnp.float32)]    # running_var
    return tuple(params)


def reference_forward(x_nchw, params):
    """Pure-JAX reference of the PyTorch eval-mode forward."""
    (w1, b1, g1, be1, m1, v1,
     w2, b2, g2, be2, m2, v2,
     w3, b3, g3, be3, m3, v3,
     w4, b4) = params
    x = x_nchw.reshape(x_nchw.shape[0], -1).astype(jnp.float32)

    def layer(h, w, b, g, be, m, v):
        h = h @ w.T + b
        h = (h - m) * (g / jnp.sqrt(v + BN_EPS)) + be
        return jnp.maximum(h, 0.0)

    h = layer(x, w1, b1, g1, be1, m1, v1)
    h = layer(h, w2, b2, g2, be2, m2, v2)
    h = layer(h, w3, b3, g3, be3, m3, v3)
    return h @ w4.T + b4


if __name__ == "__main__":
    key = jax.random.PRNGKey(0)
    k_x, k_p = jax.random.split(key)

    B = 8
    x = jax.random.normal(k_x, (B, 1, 28, 28), jnp.float32)  # MNIST-style NCHW
    params = init_params(k_p)

    out = fully_connected_mnist_forward(x, params)
    jax.block_until_ready(out)

    assert out.shape == (B, 10) and out.dtype == jnp.float32
    ref = reference_forward(x, params)
    assert jnp.allclose(out, ref, atol=1e-4, rtol=1e-4), "mismatch vs pure-JAX ref"
    print("KERNEL_OK")
</pallas_src>

<mosaic_0001>
module attributes {stable_mosaic.version = 11 : i64} {
  func.func @mlp_kernel(%arg0: i32, %arg1: memref<128x896xf32, #tpu.memory_space<vmem>>, %arg2: memref<896x256xf32, #tpu.memory_space<vmem>>, %arg3: memref<1x256xf32, #tpu.memory_space<vmem>>, %arg4: memref<256x128xf32, #tpu.memory_space<vmem>>, %arg5: memref<1x128xf32, #tpu.memory_space<vmem>>, %arg6: memref<128x64xf32, #tpu.memory_space<vmem>>, %arg7: memref<1x64xf32, #tpu.memory_space<vmem>>, %arg8: memref<64x128xf32, #tpu.memory_space<vmem>>, %arg9: memref<1x128xf32, #tpu.memory_space<vmem>>, %arg10: memref<128x128xf32, #tpu.memory_space<vmem>>) attributes {dimension_semantics = [#tpu.dimension_semantics<parallel>], iteration_bounds = array<i64: 1>, scalar_prefetch = 0 : i64, scratch_operands = 0 : i64, tpu.core_type = #tpu.core_type<tc>, window_params = [{transform_indices = @transform_0, window_bounds = array<i64: 128, 896>}, {pipeline_mode = #tpu.pipeline_mode<synchronous>, transform_indices = @transform_1, window_bounds = array<i64: 896, 256>}, {pipeline_mode = #tpu.pipeline_mode<synchronous>, transform_indices = @transform_2, window_bounds = array<i64: 1, 256>}, {pipeline_mode = #tpu.pipeline_mode<synchronous>, transform_indices = @transform_3, window_bounds = array<i64: 256, 128>}, {pipeline_mode = #tpu.pipeline_mode<synchronous>, transform_indices = @transform_4, window_bounds = array<i64: 1, 128>}, {pipeline_mode = #tpu.pipeline_mode<synchronous>, transform_indices = @transform_5, window_bounds = array<i64: 128, 64>}, {pipeline_mode = #tpu.pipeline_mode<synchronous>, transform_indices = @transform_6, window_bounds = array<i64: 1, 64>}, {pipeline_mode = #tpu.pipeline_mode<synchronous>, transform_indices = @transform_7, window_bounds = array<i64: 64, 128>}, {pipeline_mode = #tpu.pipeline_mode<synchronous>, transform_indices = @transform_8, window_bounds = array<i64: 1, 128>}, {transform_indices = @transform_9, window_bounds = array<i64: 128, 128>}]} {
    %c0 = arith.constant 0 : index
    %c0_0 = arith.constant 0 : index
    %0 = vector.load %arg1[%c0, %c0_0] : memref<128x896xf32, #tpu.memory_space<vmem>>, vector<128x896xf32>
    %c0_1 = arith.constant 0 : index
    %c0_2 = arith.constant 0 : index
    %1 = vector.load %arg2[%c0_1, %c0_2] : memref<896x256xf32, #tpu.memory_space<vmem>>, vector<896x256xf32>
    %cst = arith.constant dense<0.000000e+00> : vector<128x256xf32>
    %2 = tpu.matmul %0, %1, %cst {dimension_numbers = #tpu.dot_dimension_numbers<[1], [0], [0], [1], [0, 0, 1, 1], [], []>} : vector<128x896xf32>, vector<896x256xf32>, vector<128x256xf32> -> vector<128x256xf32>
    %c0_3 = arith.constant 0 : index
    %c0_4 = arith.constant 0 : index
    %3 = vector.load %arg3[%c0_3, %c0_4] : memref<1x256xf32, #tpu.memory_space<vmem>>, vector<1x256xf32>
    %4 = vector.broadcast %3 : vector<1x256xf32> to vector<128x256xf32>
    %5 = arith.addf %2, %4 : vector<128x256xf32>
    %cst_5 = arith.constant 0.000000e+00 : f32
    %6 = vector.broadcast %cst_5 : f32 to vector<128x256xf32>
    %7 = arith.maximumf %5, %6 : vector<128x256xf32>
    %c0_6 = arith.constant 0 : index
    %c0_7 = arith.constant 0 : index
    %8 = vector.load %arg4[%c0_6, %c0_7] : memref<256x128xf32, #tpu.memory_space<vmem>>, vector<256x128xf32>
    %cst_8 = arith.constant dense<0.000000e+00> : vector<128x128xf32>
    %9 = tpu.matmul %7, %8, %cst_8 {dimension_numbers = #tpu.dot_dimension_numbers<[1], [0], [0], [1], [0, 0, 1, 1], [], []>} : vector<128x256xf32>, vector<256x128xf32>, vector<128x128xf32> -> vector<128x128xf32>
    %c0_9 = arith.constant 0 : index
    %c0_10 = arith.constant 0 : index
    %10 = vector.load %arg5[%c0_9, %c0_10] : memref<1x128xf32, #tpu.memory_space<vmem>>, vector<1x128xf32>
    %11 = vector.broadcast %10 : vector<1x128xf32> to vector<128x128xf32>
    %12 = arith.addf %9, %11 : vector<128x128xf32>
    %cst_11 = arith.constant 0.000000e+00 : f32
    %13 = vector.broadcast %cst_11 : f32 to vector<128x128xf32>
    %14 = arith.maximumf %12, %13 : vector<128x128xf32>
    %c0_12 = arith.constant 0 : index
    %c0_13 = arith.constant 0 : index
    %15 = vector.load %arg6[%c0_12, %c0_13] : memref<128x64xf32, #tpu.memory_space<vmem>>, vector<128x64xf32>
    %cst_14 = arith.constant dense<0.000000e+00> : vector<128x64xf32>
    %16 = tpu.matmul %14, %15, %cst_14 {dimension_numbers = #tpu.dot_dimension_numbers<[1], [0], [0], [1], [0, 0, 1, 1], [], []>} : vector<128x128xf32>, vector<128x64xf32>, vector<128x64xf32> -> vector<128x64xf32>
    %c0_15 = arith.constant 0 : index
    %c0_16 = arith.constant 0 : index
    %17 = vector.load %arg7[%c0_15, %c0_16] : memref<1x64xf32, #tpu.memory_space<vmem>>, vector<1x64xf32>
    %18 = vector.broadcast %17 : vector<1x64xf32> to vector<128x64xf32>
    %19 = arith.addf %16, %18 : vector<128x64xf32>
    %cst_17 = arith.constant 0.000000e+00 : f32
    %20 = vector.broadcast %cst_17 : f32 to vector<128x64xf32>
    %21 = arith.maximumf %19, %20 : vector<128x64xf32>
    %c0_18 = arith.constant 0 : index
    %c0_19 = arith.constant 0 : index
    %22 = vector.load %arg8[%c0_18, %c0_19] : memref<64x128xf32, #tpu.memory_space<vmem>>, vector<64x128xf32>
    %cst_20 = arith.constant dense<0.000000e+00> : vector<128x128xf32>
    %23 = tpu.matmul %21, %22, %cst_20 {dimension_numbers = #tpu.dot_dimension_numbers<[1], [0], [0], [1], [0, 0, 1, 1], [], []>} : vector<128x64xf32>, vector<64x128xf32>, vector<128x128xf32> -> vector<128x128xf32>
    %c0_21 = arith.constant 0 : index
    %c0_22 = arith.constant 0 : index
    %24 = vector.load %arg9[%c0_21, %c0_22] : memref<1x128xf32, #tpu.memory_space<vmem>>, vector<1x128xf32>
    %25 = vector.broadcast %24 : vector<1x128xf32> to vector<128x128xf32>
    %26 = arith.addf %23, %25 : vector<128x128xf32>
    %c0_23 = arith.constant 0 : index
    %c0_24 = arith.constant 0 : index
    %27 = vector.load %arg10[%c0_23, %c0_24] : memref<128x128xf32, #tpu.memory_space<vmem>>, vector<128x128xf32>
    tpu.vector_store %arg10[%c0_23, %c0_24], %26 {strides = array<i32>} : memref<128x128xf32, #tpu.memory_space<vmem>>, vector<128x128xf32>,
    return
  }
  func.func @transform_0(%arg0: i32) -> (i32, i32) {
    %c0_i32 = arith.constant 0 : i32
    %c0_i32_0 = arith.constant 0 : i32
    return %arg0, %c0_i32 : i32, i32
  }
  func.func @transform_1(%arg0: i32) -> (i32, i32) {
    %c0_i32 = arith.constant 0 : i32
    %c0_i32_0 = arith.constant 0 : i32
    %c0_i32_1 = arith.constant 0 : i32
    return %c0_i32, %c0_i32_0 : i32, i32
  }
  func.func @transform_2(%arg0: i32) -> (i32, i32) {
    %c0_i32 = arith.constant 0 : i32
    %c0_i32_0 = arith.constant 0 : i32
    %c0_i32_1 = arith.constant 0 : i32
    return %c0_i32, %c0_i32_0 : i32, i32
  }
  func.func @transform_3(%arg0: i32) -> (i32, i32) {
    %c0_i32 = arith.constant 0 : i32
    %c0_i32_0 = arith.constant 0 : i32
    %c0_i32_1 = arith.constant 0 : i32
    return %c0_i32, %c0_i32_0 : i32, i32
  }
  func.func @transform_4(%arg0: i32) -> (i32, i32) {
    %c0_i32 = arith.constant 0 : i32
    %c0_i32_0 = arith.constant 0 : i32
    %c0_i32_1 = arith.constant 0 : i32
    return %c0_i32, %c0_i32_0 : i32, i32
  }
  func.func @transform_5(%arg0: i32) -> (i32, i32) {
    %c0_i32 = arith.constant 0 : i32
    %c0_i32_0 = arith.constant 0 : i32
    %c0_i32_1 = arith.constant 0 : i32
    return %c0_i32, %c0_i32_0 : i32, i32
  }
  func.func @transform_6(%arg0: i32) -> (i32, i32) {
    %c0_i32 = arith.constant 0 : i32
    %c0_i32_0 = arith.constant 0 : i32
    %c0_i32_1 = arith.constant 0 : i32
    return %c0_i32, %c0_i32_0 : i32, i32
  }
  func.func @transform_7(%arg0: i32) -> (i32, i32) {
    %c0_i32 = arith.constant 0 : i32
    %c0_i32_0 = arith.constant 0 : i32
    %c0_i32_1 = arith.constant 0 : i32
    return %c0_i32, %c0_i32_0 : i32, i32
  }
  func.func @transform_8(%arg0: i32) -> (i32, i32) {
    %c0_i32 = arith.constant 0 : i32
    %c0_i32_0 = arith.constant 0 : i32
    %c0_i32_1 = arith.constant 0 : i32
    return %c0_i32, %c0_i32_0 : i32, i32
  }
  func.func @transform_9(%arg0: i32) -> (i32, i32) {
    %c0_i32 = arith.constant 0 : i32
    %c0_i32_0 = arith.constant 0 : i32
    return %arg0, %c0_i32 : i32, i32
  }
}

</mosaic_0001>

<llo_original>
// kernel: fully_connected_mnist_forward.1
$region0: #{fully_connected_mnist_forward.1}
  #allocation0 [shape = 'u32[]', space=smem, size = 0x4, offset = 0x4, fixed_abs, tag = 'smem constant byte address 0x4 - core index']
  #allocation1 [shape = 'u32[144,128]{1,0:T(1,128)}', space=vmem, size = 0x12000, scoped, tag = 'internal scratch']
  %s0 = inlined_call_operand.vmem [shape: f32[128,896], index: 0, kind: input, shape index: {}]
  %s1 = inlined_call_operand.vmem [shape: f32[896,256], index: 1, kind: input, shape index: {}]
  %s2 = inlined_call_operand.vmem [shape: f32[1,256], index: 2, kind: input, shape index: {}]
  %s3 = inlined_call_operand.vmem [shape: f32[256,128], index: 3, kind: input, shape index: {}]
  %s4 = inlined_call_operand.vmem [shape: f32[1,128], index: 4, kind: input, shape index: {}]
  %s5 = inlined_call_operand.vmem [shape: f32[128,64], index: 5, kind: input, shape index: {}]
  %s6 = inlined_call_operand.vmem [shape: f32[1,64], index: 6, kind: input, shape index: {}]
  %s7 = inlined_call_operand.vmem [shape: f32[64,128], index: 7, kind: input, shape index: {}]
  %s8 = inlined_call_operand.vmem [shape: f32[1,128], index: 8, kind: input, shape index: {}]
  %s9 = inlined_call_operand.vmem [shape: f32[128,128], index: 9, kind: output, shape index: {}]
  %s10 = sld [smem:[#allocation0]]
  $region46: #{fully_connected_mnist_forward.1} parent=0
    _
  %s12 = ssub.s32 1, %s10
  %s13 = scalar_select 0, %s12, %s10
  // Predicated region
  $region2: #{fully_connected_mnist_forward.1} parent=0 // pred_check
    _
  $region3: #{fully_connected_mnist_forward.1} parent=0 // pred_check_branch
    %15 = sbr.rel (0) target = $region5
  $region4: #{fully_connected_mnist_forward.1} parent=0 // pred_region
    _
  $region5: #{fully_connected_mnist_forward.1} parent=0 // pred_fallthru
    _
  // Predicated region
  $region6: #{fully_connected_mnist_forward.1} parent=0 // pred_check
    _
  $region7: #{fully_connected_mnist_forward.1} parent=0 // pred_check_branch
    %17 = sbr.rel (0) target = $region9
  $region8: #{fully_connected_mnist_forward.1} parent=0 // pred_region
    _
  $region9: #{fully_connected_mnist_forward.1} parent=0 // pred_fallthru
    _
  // Predicated region
  $region10: #{fully_connected_mnist_forward.1} parent=0 // pred_check
    _
  $region11: #{fully_connected_mnist_forward.1} parent=0 // pred_check_branch
    %19 = sbr.rel (0) target = $region13
  $region12: #{fully_connected_mnist_forward.1} parent=0 // pred_region
    _
  $region13: #{fully_connected_mnist_forward.1} parent=0 // pred_fallthru
    _
  // Predicated region
  $region14: #{fully_connected_mnist_forward.1} parent=0 // pred_check
    _
  $region15: #{fully_connected_mnist_forward.1} parent=0 // pred_check_branch
    %21 = sbr.rel (0) target = $region17
  $region16: #{fully_connected_mnist_forward.1} parent=0 // pred_region
    _
  $region17: #{fully_connected_mnist_forward.1} parent=0 // pred_fallthru
    _
  // Predicated region
  $region18: #{fully_connected_mnist_forward.1} parent=0 // pred_check
    _
  $region19: #{fully_connected_mnist_forward.1} parent=0 // pred_check_branch
    %23 = sbr.rel (0) target = $region21
  $region20: #{fully_connected_mnist_forward.1} parent=0 // pred_region
    _
  $region21: #{fully_connected_mnist_forward.1} parent=0 // pred_fallthru
    _
  // Predicated region
  $region22: #{fully_connected_mnist_forward.1} parent=0 // pred_check
    _
  $region23: #{fully_connected_mnist_forward.1} parent=0 // pred_check_branch
    %25 = sbr.rel (0) target = $region25
  $region24: #{fully_connected_mnist_forward.1} parent=0 // pred_region
    _
  $region25: #{fully_connected_mnist_forward.1} parent=0 // pred_fallthru
    _
  // Predicated region
  $region26: #{fully_connected_mnist_forward.1} parent=0 // pred_check
    _
  $region27: #{fully_connected_mnist_forward.1} parent=0 // pred_check_branch
    %27 = sbr.rel (0) target = $region29
  $region28: #{fully_connected_mnist_forward.1} parent=0 // pred_region
    _
  $region29: #{fully_connected_mnist_forward.1} parent=0 // pred_fallthru
    _
  // Predicated region
  $region30: #{fully_connected_mnist_forward.1} parent=0 // pred_check
    _
  $region31: #{fully_connected_mnist_forward.1} parent=0 // pred_check_branch
    %29 = sbr.rel (0) target = $region33
  $region32: #{fully_connected_mnist_forward.1} parent=0 // pred_region
    _
  $region33: #{fully_connected_mnist_forward.1} parent=0 // pred_fallthru
    _
  // Predicated region
  $region34: #{fully_connected_mnist_forward.1} parent=0 // pred_check
    _
  $region35: #{fully_connected_mnist_forward.1} parent=0 // pred_check_branch
    %31 = sbr.rel (0) target = $region37
  $region36: #{fully_connected_mnist_forward.1} parent=0 // pred_region
    _
  $region37: #{fully_connected_mnist_forward.1} parent=0 // pred_fallthru
    _
  %v32 = vld [vmem:[%s0] sm:$0xff]
  %v33 = vld [vmem:[%s0 + $0x8] sm:$0xff]
  %v34 = vld [vmem:[%s0 + $0x10] sm:$0xff]
  %v35 = vld [vmem:[%s0 + $0x18] sm:$0xff]
  %v36 = vld [vmem:[%s0 + $0x20] sm:$0xff]
  %v37 = vld [vmem:[%s0 + $0x28] sm:$0xff]
  %v38 = vld [vmem:[%s0 + $0x30] sm:$0xff]
  %v39 = vld [vmem:[%s0 + $0x38] sm:$0xff]
  %v40 = vld [vmem:[%s0 + $0x40] sm:$0xff]
  %v41 = vld [vmem:[%s0 + $0x48] sm:$0xff]
  %v42 = vld [vmem:[%s0 + $0x50] sm:$0xff]
  %v43 = vld [vmem:[%s0 + $0x58] sm:$0xff]
  %v44 = vld [vmem:[%s0 + $0x60] sm:$0xff]
  %v45 = vld [vmem:[%s0 + $0x68] sm:$0xff]
  %v46 = vld [vmem:[%s0 + $0x70] sm:$0xff]
  %v47 = vld [vmem:[%s0 + $0x78] sm:$0xff]
  %v48 = vld [vmem:[%s0 + $0x80] sm:$0xff]
  %v49 = vld [vmem:[%s0 + $0x88] sm:$0xff]
  %v50 = vld [vmem:[%s0 + $0x90] sm:$0xff]
  %v51 = vld [vmem:[%s0 + $0x98] sm:$0xff]
  %v52 = vld [vmem:[%s0 + $0xa0] sm:$0xff]
  %v53 = vld [vmem:[%s0 + $0xa8] sm:$0xff]
  %v54 = vld [vmem:[%s0 + $0xb0] sm:$0xff]
  %v55 = vld [vmem:[%s0 + $0xb8] sm:$0xff]
  %v56 = vld [vmem:[%s0 + $0xc0] sm:$0xff]
  %v57 = vld [vmem:[%s0 + $0xc8] sm:$0xff]
  %v58 = vld [vmem:[%s0 + $0xd0] sm:$0xff]
  %v59 = vld [vmem:[%s0 + $0xd8] sm:$0xff]
  %v60 = vld [vmem:[%s0 + $0xe0] sm:$0xff]
  %v61 = vld [vmem:[%s0 + $0xe8] sm:$0xff]
  %v62 = vld [vmem:[%s0 + $0xf0] sm:$0xff]
  %v63 = vld [vmem:[%s0 + $0xf8] sm:$0xff]
  %v64 = vld [vmem:[%s0 + $0x100] sm:$0xff]
  %v65 = vld [vmem:[%s0 + $0x108] sm:$0xff]
  %v66 = vld [vmem:[%s0 + $0x110] sm:$0xff]
  %v67 = vld [vmem:[%s0 + $0x118] sm:$0xff]
  %v68 = vld [vmem:[%s0 + $0x120] sm:$0xff]
  %v69 = vld [vmem:[%s0 + $0x128] sm:$0xff]
  %v70 = vld [vmem:[%s0 + $0x130] sm:$0xff]
  %v71 = vld [vmem:[%s0 + $0x138] sm:$0xff]
  %v72 = vld [vmem:[%s0 + $0x140] sm:$0xff]
  %v73 = vld [vmem:[%s0 + $0x148] sm:$0xff]
  %v74 = vld [vmem:[%s0 + $0x150] sm:$0xff]
  %v75 = vld [vmem:[%s0 + $0x158] sm:$0xff]
  %v76 = vld [vmem:[%s0 + $0x160] sm:$0xff]
  %v77 = vld [vmem:[%s0 + $0x168] sm:$0xff]
  %v78 = vld [vmem:[%s0 + $0x170] sm:$0xff]
  %v79 = vld [vmem:[%s0 + $0x178] sm:$0xff]
  %v80 = vld [vmem:[%s0 + $0x180] sm:$0xff]
  %v81 = vld [vmem:[%s0 + $0x188] sm:$0xff]
  %v82 = vld [vmem:[%s0 + $0x190] sm:$0xff]
  %v83 = vld [vmem:[%s0 + $0x198] sm:$0xff]
  %v84 = vld [vmem:[%s0 + $0x1a0] sm:$0xff]
  %v85 = vld [vmem:[%s0 + $0x1a8] sm:$0xff]
  %v86 = vld [vmem:[%s0 + $0x1b0] sm:$0xff]
  %v87 = vld [vmem:[%s0 + $0x1b8] sm:$0xff]
  %v88 = vld [vmem:[%s0 + $0x1c0] sm:$0xff]
  %v89 = vld [vmem:[%s0 + $0x1c8] sm:$0xff]
  %v90 = vld [vmem:[%s0 + $0x1d0] sm:$0xff]
  %v91 = vld [vmem:[%s0 + $0x1d8] sm:$0xff]
  %v92 = vld [vmem:[%s0 + $0x1e0] sm:$0xff]
  %v93 = vld [vmem:[%s0 + $0x1e8] sm:$0xff]
  %v94 = vld [vmem:[%s0 + $0x1f0] sm:$0xff]
  %v95 = vld [vmem:[%s0 + $0x1f8] sm:$0xff]
  %v96 = vld [vmem:[%s0 + $0x200] sm:$0xff]
  %v97 = vld [vmem:[%s0 + $0x208] sm:$0xff]
  %v98 = vld [vmem:[%s0 + $0x210] sm:$0xff]
  %v99 = vld [vmem:[%s0 + $0x218] sm:$0xff]
  %v100 = vld [vmem:[%s0 + $0x220] sm:$0xff]
  %v101 = vld [vmem:[%s0 + $0x228] sm:$0xff]
  %v102 = vld [vmem:[%s0 + $0x230] sm:$0xff]
  %v103 = vld [vmem:[%s0 + $0x238] sm:$0xff]
  %v104 = vld [vmem:[%s0 + $0x240] sm:$0xff]
  %v105 = vld [vmem:[%s0 + $0x248] sm:$0xff]
  %v106 = vld [vmem:[%s0 + $0x250] sm:$0xff]
  %v107 = vld [vmem:[%s0 + $0x258] sm:$0xff]
  %v108 = vld [vmem:[%s0 + $0x260] sm:$0xff]
  %v109 = vld [vmem:[%s0 + $0x268] sm:$0xff]
  %v110 = vld [vmem:[%s0 + $0x270] sm:$0xff]
  %v111 = vld [vmem:[%s0 + $0x278] sm:$0xff]
  %v112 = vld [vmem:[%s0 + $0x280] sm:$0xff]
  %v113 = vld [vmem:[%s0 + $0x288] sm:$0xff]
  %v114 = vld [vmem:[%s0 + $0x290] sm:$0xff]
  %v115 = vld [vmem:[%s0 + $0x298] sm:$0xff]
  %v116 = vld [vmem:[%s0 + $0x2a0] sm:$0xff]
  %v117 = vld [vmem:[%s0 + $0x2a8] sm:$0xff]
  %v118 = vld [vmem:[%s0 + $0x2b0] sm:$0xff]
  %v119 = vld [vmem:[%s0 + $0x2b8] sm:$0xff]
  %v120 = vld [vmem:[%s0 + $0x2c0] sm:$0xff]
  %v121 = vld [vmem:[%s0 + $0x2c8] sm:$0xff]
  %v122 = vld [vmem:[%s0 + $0x2d0] sm:$0xff]
  %v123 = vld [vmem:[%s0 + $0x2d8] sm:$0xff]
  %v124 = vld [vmem:[%s0 + $0x2e0] sm:$0xff]
  %v125 = vld [vmem:[%s0 + $0x2e8] sm:$0xff]
  %v126 = vld [vmem:[%s0 + $0x2f0] sm:$0xff]
  %v127 = vld [vmem:[%s0 + $0x2f8] sm:$0xff]
  %v128 = vld [vmem:[%s0 + $0x300] sm:$0xff]
  %v129 = vld [vmem:[%s0 + $0x308] sm:$0xff]
  %v130 = vld [vmem:[%s0 + $0x310] sm:$0xff]
  %v131 = vld [vmem:[%s0 + $0x318] sm:$0xff]
  %v132 = vld [vmem:[%s0 + $0x320] sm:$0xff]
  %v133 = vld [vmem:[%s0 + $0x328] sm:$0xff]
  %v134 = vld [vmem:[%s0 + $0x330] sm:$0xff]
  %v135 = vld [vmem:[%s0 + $0x338] sm:$0xff]
  %v136 = vld [vmem:[%s0 + $0x340] sm:$0xff]
  %v137 = vld [vmem:[%s0 + $0x348] sm:$0xff]
  %v138 = vld [vmem:[%s0 + $0x350] sm:$0xff]
  %v139 = vld [vmem:[%s0 + $0x358] sm:$0xff]
  %v140 = vld [vmem:[%s0 + $0x360] sm:$0xff]
  %v141 = vld [vmem:[%s0 + $0x368] sm:$0xff]
  %v142 = vld [vmem:[%s0 + $0x370] sm:$0xff]
  %v143 = vld [vmem:[%s0 + $0x378] sm:$0xff]
  %v144 = vld [vmem:[%s1] sm:$0xff]
  %v145 = vld [vmem:[%s1 + $0x8] sm:$0xff]
  %v146 = vld [vmem:[%s1 + $0x10] sm:$0xff]
  %v147 = vld [vmem:[%s1 + $0x18] sm:$0xff]
  %v148 = vld [vmem:[%s1 + $0x20] sm:$0xff]
  %v149 = vld [vmem:[%s1 + $0x28] sm:$0xff]
  %v150 = vld [vmem:[%s1 + $0x30] sm:$0xff]
  %v151 = vld [vmem:[%s1 + $0x38] sm:$0xff]
  %v152 = vld [vmem:[%s1 + $0x40] sm:$0xff]
  %v153 = vld [vmem:[%s1 + $0x48] sm:$0xff]
  %v154 = vld [vmem:[%s1 + $0x50] sm:$0xff]
  %v155 = vld [vmem:[%s1 + $0x58] sm:$0xff]
  %v156 = vld [vmem:[%s1 + $0x60] sm:$0xff]
  %v157 = vld [vmem:[%s1 + $0x68] sm:$0xff]
  %v158 = vld [vmem:[%s1 + $0x70] sm:$0xff]
  %v159 = vld [vmem:[%s1 + $0x78] sm:$0xff]
  %v160 = vld [vmem:[%s1 + $0x80] sm:$0xff]
  %v161 = vld [vmem:[%s1 + $0x88] sm:$0xff]
  %v162 = vld [vmem:[%s1 + $0x90] sm:$0xff]
  %v163 = vld [vmem:[%s1 + $0x98] sm:$0xff]
  %v164 = vld [vmem:[%s1 + $0xa0] sm:$0xff]
  %v165 = vld [vmem:[%s1 + $0xa8] sm:$0xff]
  %v166 = vld [vmem:[%s1 + $0xb0] sm:$0xff]
  %v167 = vld [vmem:[%s1 + $0xb8] sm:$0xff]
  %v168 = vld [vmem:[%s1 + $0xc0] sm:$0xff]
  %v169 = vld [vmem:[%s1 + $0xc8] sm:$0xff]
  %v170 = vld [vmem:[%s1 + $0xd0] sm:$0xff]
  %v171 = vld [vmem:[%s1 + $0xd8] sm:$0xff]
  %v172 = vld [vmem:[%s1 + $0xe0] sm:$0xff]
  %v173 = vld [vmem:[%s1 + $0xe8] sm:$0xff]
  %v174 = vld [vmem:[%s1 + $0xf0] sm:$0xff]
  %v175 = vld [vmem:[%s1 + $0xf8] sm:$0xff]
  %v176 = vld [vmem:[%s1 + $0x100] sm:$0xff]
  %v177 = vld [vmem:[%s1 + $0x108] sm:$0xff]
  %v178 = vld [vmem:[%s1 + $0x110] sm:$0xff]
  %v179 = vld [vmem:[%s1 + $0x118] sm:$0xff]
  %v180 = vld [vmem:[%s1 + $0x120] sm:$0xff]
  %v181 = vld [vmem:[%s1 + $0x128] sm:$0xff]
  %v182 = vld [vmem:[%s1 + $0x130] sm:$0xff]
  %v183 = vld [vmem:[%s1 + $0x138] sm:$0xff]
  %v184 = vld [vmem:[%s1 + $0x140] sm:$0xff]
  %v185 = vld [vmem:[%s1 + $0x148] sm:$0xff]
  %v186 = vld [vmem:[%s1 + $0x150] sm:$0xff]
  %v187 = vld [vmem:[%s1 + $0x158] sm:$0xff]
  %v188 = vld [vmem:[%s1 + $0x160] sm:$0xff]
  %v189 = vld [vmem:[%s1 + $0x168] sm:$0xff]
  %v190 = vld [vmem:[%s1 + $0x170] sm:$0xff]
  %v191 = vld [vmem:[%s1 + $0x178] sm:$0xff]
  %v192 = vld [vmem:[%s1 + $0x180] sm:$0xff]
  %v193 = vld [vmem:[%s1 + $0x188] sm:$0xff]
  %v194 = vld [vmem:[%s1 + $0x190] sm:$0xff]
  %v195 = vld [vmem:[%s1 + $0x198] sm:$0xff]
  %v196 = vld [vmem:[%s1 + $0x1a0] sm:$0xff]
  %v197 = vld [vmem:[%s1 + $0x1a8] sm:$0xff]
  %v198 = vld [vmem:[%s1 + $0x1b0] sm:$0xff]
  %v199 = vld [vmem:[%s1 + $0x1b8] sm:$0xff]
  %v200 = vld [vmem:[%s1 + $0x1c0] sm:$0xff]
  %v201 = vld [vmem:[%s1 + $0x1c8] sm:$0xff]
  %v202 = vld [vmem:[%s1 + $0x1d0] sm:$0xff]
  %v203 = vld [vmem:[%s1 + $0x1d8] sm:$0xff]
  %v204 = vld [vmem:[%s1 + $0x1e0] sm:$0xff]
  %v205 = vld [vmem:[%s1 + $0x1e8] sm:$0xff]
  %v206 = vld [vmem:[%s1 + $0x1f0] sm:$0xff]
  %v207 = vld [vmem:[%s1 + $0x1f8] sm:$0xff]
  %v208 = vld [vmem:[%s1 + $0x200] sm:$0xff]
  %v209 = vld [vmem:[%s1 + $0x208] sm:$0xff]
  %v210 = vld [vmem:[%s1 + $0x210] sm:$0xff]
  %v211 = vld [vmem:[%s1 + $0x218] sm:$0xff]
  %v212 = vld [vmem:[%s1 + $0x220] sm:$0xff]
  %v213 = vld [vmem:[%s1 + $0x228] sm:$0xff]
  %v214 = vld [vmem:[%s1 + $0x230] sm:$0xff]
  %v215 = vld [vmem:[%s1 + $0x238] sm:$0xff]
  %v216 = vld [vmem:[%s1 + $0x240] sm:$0xff]
  %v217 = vld [vmem:[%s1 + $0x248] sm:$0xff]
  %v218 = vld [vmem:[%s1 + $0x250] sm:$0xff]
  %v219 = vld [vmem:[%s1 + $0x258] sm:$0xff]
  %v220 = vld [vmem:[%s1 + $0x260] sm:$0xff]
  %v221 = vld [vmem:[%s1 + $0x268] sm:$0xff]
  %v222 = vld [vmem:[%s1 + $0x270] sm:$0xff]
  %v223 = vld [vmem:[%s1 + $0x278] sm:$0xff]
  %v224 = vld [vmem:[%s1 + $0x280] sm:$0xff]
  %v225 = vld [vmem:[%s1 + $0x288] sm:$0xff]
  %v226 = vld [vmem:[%s1 + $0x290] sm:$0xff]
  %v227 = vld [vmem:[%s1 + $0x298] sm:$0xff]
  %v228 = vld [vmem:[%s1 + $0x2a0] sm:$0xff]
  %v229 = vld [vmem:[%s1 + $0x2a8] sm:$0xff]
  %v230 = vld [vmem:[%s1 + $0x2b0] sm:$0xff]
  %v231 = vld [vmem:[%s1 + $0x2b8] sm:$0xff]
  %v232 = vld [vmem:[%s1 + $0x2c0] sm:$0xff]
  %v233 = vld [vmem:[%s1 + $0x2c8] sm:$0xff]
  %v234 = vld [vmem:[%s1 + $0x2d0] sm:$0xff]
  %v235 = vld [vmem:[%s1 + $0x2d8] sm:$0xff]
  %v236 = vld [vmem:[%s1 + $0x2e0] sm:$0xff]
  %v237 = vld [vmem:[%s1 + $0x2e8] sm:$0xff]
  %v238 = vld [vmem:[%s1 + $0x2f0] sm:$0xff]
  %v239 = vld [vmem:[%s1 + $0x2f8] sm:$0xff]
  %v240 = vld [vmem:[%s1 + $0x300] sm:$0xff]
  %v241 = vld [vmem:[%s1 + $0x308] sm:$0xff]
  %v242 = vld [vmem:[%s1 + $0x310] sm:$0xff]
  %v243 = vld [vmem:[%s1 + $0x318] sm:$0xff]
  %v244 = vld [vmem:[%s1 + $0x320] sm:$0xff]
  %v245 = vld [vmem:[%s1 + $0x328] sm:$0xff]
  %v246 = vld [vmem:[%s1 + $0x330] sm:$0xff]
  %v247 = vld [vmem:[%s1 + $0x338] sm:$0xff]
  %v248 = vld [vmem:[%s1 + $0x340] sm:$0xff]
  %v249 = vld [vmem:[%s1 + $0x348] sm:$0xff]
  %v250 = vld [vmem:[%s1 + $0x350] sm:$0xff]
  %v251 = vld [vmem:[%s1 + $0x358] sm:$0xff]
  %v252 = vld [vmem:[%s1 + $0x360] sm:$0xff]
  %v253 = vld [vmem:[%s1 + $0x368] sm:$0xff]
  %v254 = vld [vmem:[%s1 + $0x370] sm:$0xff]
  %v255 = vld [vmem:[%s1 + $0x378] sm:$0xff]
  %v256 = vld [vmem:[%s1 + $0x380] sm:$0xff]
  %v257 = vld [vmem:[%s1 + $0x388] sm:$0xff]
  %v258 = vld [vmem:[%s1 + $0x390] sm:$0xff]
  %v259 = vld [vmem:[%s1 + $0x398] sm:$0xff]
  %v260 = vld [vmem:[%s1 + $0x3a0] sm:$0xff]
  %v261 = vld [vmem:[%s1 + $0x3a8] sm:$0xff]
  %v262 = vld [vmem:[%s1 + $0x3b0] sm:$0xff]
  %v263 = vld [vmem:[%s1 + $0x3b8] sm:$0xff]
  %v264 = vld [vmem:[%s1 + $0x3c0] sm:$0xff]
  %v265 = vld [vmem:[%s1 + $0x3c8] sm:$0xff]
  %v266 = vld [vmem:[%s1 + $0x3d0] sm:$0xff]
  %v267 = vld [vmem:[%s1 + $0x3d8] sm:$0xff]
  %v268 = vld [vmem:[%s1 + $0x3e0] sm:$0xff]
  %v269 = vld [vmem:[%s1 + $0x3e8] sm:$0xff]
  %v270 = vld [vmem:[%s1 + $0x3f0] sm:$0xff]
  %v271 = vld [vmem:[%s1 + $0x3f8] sm:$0xff]
  %v272 = vld [vmem:[%s1 + $0x400] sm:$0xff]
  %v273 = vld [vmem:[%s1 + $0x408] sm:$0xff]
  %v274 = vld [vmem:[%s1 + $0x410] sm:$0xff]
  %v275 = vld [vmem:[%s1 + $0x418] sm:$0xff]
  %v276 = vld [vmem:[%s1 + $0x420] sm:$0xff]
  %v277 = vld [vmem:[%s1 + $0x428] sm:$0xff]
  %v278 = vld [vmem:[%s1 + $0x430] sm:$0xff]
  %v279 = vld [vmem:[%s1 + $0x438] sm:$0xff]
  %v280 = vld [vmem:[%s1 + $0x440] sm:$0xff]
  %v281 = vld [vmem:[%s1 + $0x448] sm:$0xff]
  %v282 = vld [vmem:[%s1 + $0x450] sm:$0xff]
  %v283 = vld [vmem:[%s1 + $0x458] sm:$0xff]
  %v284 = vld [vmem:[%s1 + $0x460] sm:$0xff]
  %v285 = vld [vmem:[%s1 + $0x468] sm:$0xff]
  %v286 = vld [vmem:[%s1 + $0x470] sm:$0xff]
  %v287 = vld [vmem:[%s1 + $0x478] sm:$0xff]
  %v288 = vld [vmem:[%s1 + $0x480] sm:$0xff]
  %v289 = vld [vmem:[%s1 + $0x488] sm:$0xff]
  %v290 = vld [vmem:[%s1 + $0x490] sm:$0xff]
  %v291 = vld [vmem:[%s1 + $0x498] sm:$0xff]
  %v292 = vld [vmem:[%s1 + $0x4a0] sm:$0xff]
  %v293 = vld [vmem:[%s1 + $0x4a8] sm:$0xff]
  %v294 = vld [vmem:[%s1 + $0x4b0] sm:$0xff]
  %v295 = vld [vmem:[%s1 + $0x4b8] sm:$0xff]
  %v296 = vld [vmem:[%s1 + $0x4c0] sm:$0xff]
  %v297 = vld [vmem:[%s1 + $0x4c8] sm:$0xff]
  %v298 = vld [vmem:[%s1 + $0x4d0] sm:$0xff]
  %v299 = vld [vmem:[%s1 + $0x4d8] sm:$0xff]
  %v300 = vld [vmem:[%s1 + $0x4e0] sm:$0xff]
  %v301 = vld [vmem:[%s1 + $0x4e8] sm:$0xff]
  %v302 = vld [vmem:[%s1 + $0x4f0] sm:$0xff]
  %v303 = vld [vmem:[%s1 + $0x4f8] sm:$0xff]
  %v304 = vld [vmem:[%s1 + $0x500] sm:$0xff]
  %v305 = vld [vmem:[%s1 + $0x508] sm:$0xff]
  %v306 = vld [vmem:[%s1 + $0x510] sm:$0xff]
  %v307 = vld [vmem:[%s1 + $0x518] sm:$0xff]
  %v308 = vld [vmem:[%s1 + $0x520] sm:$0xff]
  %v309 = vld [vmem:[%s1 + $0x528] sm:$0xff]
  %v310 = vld [vmem:[%s1 + $0x530] sm:$0xff]
  %v311 = vld [vmem:[%s1 + $0x538] sm:$0xff]
  %v312 = vld [vmem:[%s1 + $0x540] sm:$0xff]
  %v313 = vld [vmem:[%s1 + $0x548] sm:$0xff]
  %v314 = vld [vmem:[%s1 + $0x550] sm:$0xff]
  %v315 = vld [vmem:[%s1 + $0x558] sm:$0xff]
  %v316 = vld [vmem:[%s1 + $0x560] sm:$0xff]
  %v317 = vld [vmem:[%s1 + $0x568] sm:$0xff]
  %v318 = vld [vmem:[%s1 + $0x570] sm:$0xff]
  %v319 = vld [vmem:[%s1 + $0x578] sm:$0xff]
  %v320 = vld [vmem:[%s1 + $0x580] sm:$0xff]
  %v321 = vld [vmem:[%s1 + $0x588] sm:$0xff]
  %v322 = vld [vmem:[%s1 + $0x590] sm:$0xff]
  %v323 = vld [vmem:[%s1 + $0x598] sm:$0xff]
  %v324 = vld [vmem:[%s1 + $0x5a0] sm:$0xff]
  %v325 = vld [vmem:[%s1 + $0x5a8] sm:$0xff]
  %v326 = vld [vmem:[%s1 + $0x5b0] sm:$0xff]
  %v327 = vld [vmem:[%s1 + $0x5b8] sm:$0xff]
  %v328 = vld [vmem:[%s1 + $0x5c0] sm:$0xff]
  %v329 = vld [vmem:[%s1 + $0x5c8] sm:$0xff]
  %v330 = vld [vmem:[%s1 + $0x5d0] sm:$0xff]
  %v331 = vld [vmem:[%s1 + $0x5d8] sm:$0xff]
  %v332 = vld [vmem:[%s1 + $0x5e0] sm:$0xff]
  %v333 = vld [vmem:[%s1 + $0x5e8] sm:$0xff]
  %v334 = vld [vmem:[%s1 + $0x5f0] sm:$0xff]
  %v335 = vld [vmem:[%s1 + $0x5f8] sm:$0xff]
  %v336 = vld [vmem:[%s1 + $0x600] sm:$0xff]
  %v337 = vld [vmem:[%s1 + $0x608] sm:$0xff]
  %v338 = vld [vmem:[%s1 + $0x610] sm:$0xff]
  %v339 = vld [vmem:[%s1 + $0x618] sm:$0xff]
  %v340 = vld [vmem:[%s1 + $0x620] sm:$0xff]
  %v341 = vld [vmem:[%s1 + $0x628] sm:$0xff]
  %v342 = vld [vmem:[%s1 + $0x630] sm:$0xff]
  %v343 = vld [vmem:[%s1 + $0x638] sm:$0xff]
  %v344 = vld [vmem:[%s1 + $0x640] sm:$0xff]
  %v345 = vld [vmem:[%s1 + $0x648] sm:$0xff]
  %v346 = vld [vmem:[%s1 + $0x650] sm:$0xff]
  %v347 = vld [vmem:[%s1 + $0x658] sm:$0xff]
  %v348 = vld [vmem:[%s1 + $0x660] sm:$0xff]
  %v349 = vld [vmem:[%s1 + $0x668] sm:$0xff]
  %v350 = vld [vmem:[%s1 + $0x670] sm:$0xff]
  %v351 = vld [vmem:[%s1 + $0x678] sm:$0xff]
  %v352 = vld [vmem:[%s1 + $0x680] sm:$0xff]
  %v353 = vld [vmem:[%s1 + $0x688] sm:$0xff]
  %v354 = vld [vmem:[%s1 + $0x690] sm:$0xff]
  %v355 = vld [vmem:[%s1 + $0x698] sm:$0xff]
  %v356 = vld [vmem:[%s1 + $0x6a0] sm:$0xff]
  %v357 = vld [vmem:[%s1 + $0x6a8] sm:$0xff]
  %v358 = vld [vmem:[%s1 + $0x6b0] sm:$0xff]
  %v359 = vld [vmem:[%s1 + $0x6b8] sm:$0xff]
  %v360 = vld [vmem:[%s1 + $0x6c0] sm:$0xff]
  %v361 = vld [vmem:[%s1 + $0x6c8] sm:$0xff]
  %v362 = vld [vmem:[%s1 + $0x6d0] sm:$0xff]
  %v363 = vld [vmem:[%s1 + $0x6d8] sm:$0xff]
  %v364 = vld [vmem:[%s1 + $0x6e0] sm:$0xff]
  %v365 = vld [vmem:[%s1 + $0x6e8] sm:$0xff]
  %v366 = vld [vmem:[%s1 + $0x6f0] sm:$0xff]
  %v367 = vld [vmem:[%s1 + $0x6f8] sm:$0xff]
  %v368 = vld [vmem:[%s2] sm:$0x3]
  %v370 = vlaneseq
  %v371 = vshrl.u32 %v370, 7
  %v372 = vsub.s32 0, %v371
  %v373 = vrot.slane %v368, %v372
  %v374 = vlaneseq
  %v375 = vshrl.u32 %v374, 7
  %v376 = vsub.s32 1, %v375
  %v377 = vrot.slane %v368, %v376
  %380 = vmatprep.subr.mxu0 %v145
  %381 = vmatpush1.msra.mxu0 %v144
  %382 = vmatprep.subr.mxu0 %v147
  %383 = vmatpush1.msra.mxu0 %v146
  %384 = vmatprep.subr.mxu0 %v149
  %385 = vmatpush1.msra.mxu0 %v148
  %386 = vmatprep.subr.mxu0 %v151
  %387 = vmatpush1.msra.mxu0 %v150
  %388 = vmatprep.subr.mxu0 %v153
  %389 = vmatpush1.msra.mxu0 %v152
  %390 = vmatprep.subr.mxu0 %v155
  %391 = vmatpush1.msra.mxu0 %v154
  %392 = vmatprep.subr.mxu0 %v157
  %393 = vmatpush1.msra.mxu0 %v156
  %394 = vmatprep.subr.mxu0 %v159
  %395 = vmatpush1.msra.mxu0 %v158
  %396 = vmatprep.subr.mxu0 %v161
  %397 = vmatpush1.msra.mxu0 %v160
  %398 = vmatprep.subr.mxu0 %v163
  %399 = vmatpush1.msra.mxu0 %v162
  %400 = vmatprep.subr.mxu0 %v165
  %401 = vmatpush1.msra.mxu0 %v164
  %402 = vmatprep.subr.mxu0 %v167
  %403 = vmatpush1.msra.mxu0 %v166
  %404 = vmatprep.subr.mxu0 %v169
  %405 = vmatpush1.msra.mxu0 %v168
  %406 = vmatprep.subr.mxu0 %v171
  %407 = vmatpush1.msra.mxu0 %v170
  %408 = vmatprep.subr.mxu0 %v173
  %409 = vmatpush1.msra.mxu0 %v172
  %410 = vmatprep.subr.mxu0 %v175
  %411 = vmatpush1.msra.mxu0 %v174
  %412 = vmatprep.subr.mxu0 %v177
  %413 = vmatpush1.msra.mxu0 %v176
  %414 = vmatprep.subr.mxu0 %v179
  %415 = vmatpush1.msra.mxu0 %v178
  %416 = vmatprep.subr.mxu0 %v181
  %417 = vmatpush1.msra.mxu0 %v180
  %418 = vmatprep.subr.mxu0 %v183
  %419 = vmatpush1.msra.mxu0 %v182
  %420 = vmatprep.subr.mxu0 %v185
  %421 = vmatpush1.msra.mxu0 %v184
  %422 = vmatprep.subr.mxu0 %v187
  %423 = vmatpush1.msra.mxu0 %v186
  %424 = vmatprep.subr.mxu0 %v189
  %425 = vmatpush1.msra.mxu0 %v188
  %426 = vmatprep.subr.mxu0 %v191
  %427 = vmatpush1.msra.mxu0 %v190
  %428 = vmatprep.subr.mxu0 %v193
  %429 = vmatpush1.msra.mxu0 %v192
  %430 = vmatprep.subr.mxu0 %v195
  %431 = vmatpush1.msra.mxu0 %v194
  %432 = vmatprep.subr.mxu0 %v197
  %433 = vmatpush1.msra.mxu0 %v196
  %434 = vmatprep.subr.mxu0 %v199
  %435 = vmatpush1.msra.mxu0 %v198
  %436 = vmatprep.subr.mxu0 %v201
  %437 = vmatpush1.msra.mxu0 %v200
  %438 = vmatprep.subr.mxu0 %v203
  %439 = vmatpush1.msra.mxu0 %v202
  %440 = vmatprep.subr.mxu0 %v205
  %441 = vmatpush1.msra.mxu0 %v204
  %442 = vmatprep.subr.mxu0 %v207
  %443 = vmatpush1.msra.mxu0 %v206
  %444 = vmatprep.mubr.f32.mxu0 %v33
  %445 = vmatmul.mubr.f32.gmra.mrb[0].mxu0 %v32
  %v446 = vpop.f32.mrb[0].mxu0
  %v447 = vadd.f32 %v373, %v446
  %v448 = vpop.f32.mrb[0].mxu0
  %v449 = vadd.f32 %v377, %v448
  %450 = vmatprep.mubr.f32.mxu0 %v40
  %451 = vmatmul.mubr.f32.gmra.mrb[0].mxu0 %v39
  %v452 = vpop.f32.mrb[0].mxu0
  %v453 = vadd.f32 %v373, %v452
  %v454 = vpop.f32.mrb[0].mxu0
  %v455 = vadd.f32 %v377, %v454
  %456 = vmatprep.mubr.f32.mxu0 %v47
  %457 = vmatmul.mubr.f32.gmra.mrb[0].mxu0 %v46
  %v458 = vpop.f32.mrb[0].mxu0
  %v459 = vadd.f32 %v373, %v458
  %v460 = vpop.f32.mrb[0].mxu0
  %v461 = vadd.f32 %v377, %v460
  %462 = vmatprep.mubr.f32.mxu0 %v54
  %463 = vmatmul.mubr.f32.gmra.mrb[0].mxu0 %v53
  %v464 = vpop.f32.mrb[0].mxu0
  %v465 = vadd.f32 %v373, %v464
  %v466 = vpop.f32.mrb[0].mxu0
  %v467 = vadd.f32 %v377, %v466
  %468 = vmatprep.mubr.f32.mxu0 %v61
  %469 = vmatmul.mubr.f32.gmra.mrb[0].mxu0 %v60
  %v470 = vpop.f32.mrb[0].mxu0
  %v471 = vadd.f32 %v373, %v470
  %v472 = vpop.f32.mrb[0].mxu0
  %v473 = vadd.f32 %v377, %v472
  %474 = vmatprep.mubr.f32.mxu0 %v68
  %475 = vmatmul.mubr.f32.gmra.mrb[0].mxu0 %v67
  %v476 = vpop.f32.mrb[0].mxu0
  %v477 = vadd.f32 %v373, %v476
  %v478 = vpop.f32.mrb[0].mxu0
  %v479 = vadd.f32 %v377, %v478
  %480 = vmatprep.mubr.f32.mxu0 %v75
  %481 = vmatmul.mubr.f32.gmra.mrb[0].mxu0 %v74
  %v482 = vpop.f32.mrb[0].mxu0
  %v483 = vadd.f32 %v373, %v482
  %v484 = vpop.f32.mrb[0].mxu0
  %v485 = vadd.f32 %v377, %v484
  %486 = vmatprep.mubr.f32.mxu0 %v82
  %487 = vmatmul.mubr.f32.gmra.mrb[0].mxu0 %v81
  %v488 = vpop.f32.mrb[0].mxu0
  %v489 = vadd.f32 %v373, %v488
  %v490 = vpop.f32.mrb[0].mxu0
  %v491 = vadd.f32 %v377, %v490
  %492 = vmatprep.mubr.f32.mxu0 %v89
  %493 = vmatmul.mubr.f32.gmra.mrb[0].mxu0 %v88
  %v494 = vpop.f32.mrb[0].mxu0
  %v495 = vadd.f32 %v373, %v494
  %v496 = vpop.f32.mrb[0].mxu0
  %v497 = vadd.f32 %v377, %v496
  %498 = vmatprep.mubr.f32.mxu0 %v96
  %499 = vmatmul.mubr.f32.gmra.mrb[0].mxu0 %v95
  %v500 = vpop.f32.mrb[0].mxu0
  %v501 = vadd.f32 %v373, %v500
  %v502 = vpop.f32.mrb[0].mxu0
  %v503 = vadd.f32 %v377, %v502
  %504 = vmatprep.mubr.f32.mxu0 %v103
  %505 = vmatmul.mubr.f32.gmra.mrb[0].mxu0 %v102
  %v506 = vpop.f32.mrb[0].mxu0
  %v507 = vadd.f32 %v373, %v506
  %v508 = vpop.f32.mrb[0].mxu0
  %v509 = vadd.f32 %v377, %v508
  %510 = vmatprep.mubr.f32.mxu0 %v110
  %511 = vmatmul.mubr.f32.gmra.mrb[0].mxu0 %v109
  %v512 = vpop.f32.mrb[0].mxu0
  %v513 = vadd.f32 %v373, %v512
  %v514 = vpop.f32.mrb[0].mxu0
  %v515 = vadd.f32 %v377, %v514
  %516 = vmatprep.mubr.f32.mxu0 %v117
  %517 = vmatmul.mubr.f32.gmra.mrb[0].mxu0 %v116
  %v518 = vpop.f32.mrb[0].mxu0
  %v519 = vadd.f32 %v373, %v518
  %v520 = vpop.f32.mrb[0].mxu0
  %v521 = vadd.f32 %v377, %v520
  %522 = vmatprep.mubr.f32.mxu0 %v124
  %523 = vmatmul.mubr.f32.gmra.mrb[0].mxu0 %v123
  %v524 = vpop.f32.mrb[0].mxu0
  %v525 = vadd.f32 %v373, %v524
  %v526 = vpop.f32.mrb[0].mxu0
  %v527 = vadd.f32 %v377, %v526
  %528 = vmatprep.mubr.f32.mxu0 %v131
  %529 = vmatmul.mubr.f32.gmra.mrb[0].mxu0 %v130
  %v530 = vpop.f32.mrb[0].mxu0
  %v531 = vadd.f32 %v373, %v530
  %v532 = vpop.f32.mrb[0].mxu0
  %v533 = vadd.f32 %v377, %v532
  %534 = vmatprep.mubr.f32.mxu0 %v138
  %535 = vmatmul.mubr.f32.gmra.mrb[0].mxu0 %v137
  %v536 = vpop.f32.mrb[0].mxu0
  %v537 = vadd.f32 %v373, %v536
  %v538 = vpop.f32.mrb[0].mxu0
  %v539 = vadd.f32 %v377, %v538
  %540 = vdwg.mxu0
  %541 = vmatprep.subr.mxu0 %v209
  %542 = vmatpush1.msra.mxu0 %v208
  %543 = vmatprep.subr.mxu0 %v211
  %544 = vmatpush1.msra.mxu0 %v210
  %545 = vmatprep.subr.mxu0 %v213
  %546 = vmatpush1.msra.mxu0 %v212
  %547 = vmatprep.subr.mxu0 %v215
  %548 = vmatpush1.msra.mxu0 %v214
  %549 = vmatprep.subr.mxu0 %v217
  %550 = vmatpush1.msra.mxu0 %v216
  %551 = vmatprep.subr.mxu0 %v219
  %552 = vmatpush1.msra.mxu0 %v218
  %553 = vmatprep.subr.mxu0 %v221
  %554 = vmatpush1.msra.mxu0 %v220
  %555 = vmatprep.subr.mxu0 %v223
  %556 = vmatpush1.msra.mxu0 %v222
  %557 = vmatprep.subr.mxu0 %v225
  %558 = vmatpush1.msra.mxu0 %v224
  %559 = vmatprep.subr.mxu0 %v227
  %560 = vmatpush1.msra.mxu0 %v226
  %561 = vmatprep.subr.mxu0 %v229
  %562 = vmatpush1.msra.mxu0 %v228
  %563 = vmatprep.subr.mxu0 %v231
  %564 = vmatpush1.msra.mxu0 %v230
  %565 = vmatprep.subr.mxu0 %v233
  %566 = vmatpush1.msra.mxu0 %v232
  %567 = vmatprep.subr.mxu0 %v235
  %568 = vmatpush1.msra.mxu0 %v234
  %569 = vmatprep.subr.mxu0 %v237
  %570 = vmatpush1.msra.mxu0 %v236
  %571 = vmatprep.subr.mxu0 %v239
  %572 = vmatpush1.msra.mxu0 %v238
  %573 = vmatprep.subr.mxu0 %v241
  %574 = vmatpush1.msra.mxu0 %v240
  %575 = vmatprep.subr.mxu0 %v243
  %576 = vmatpush1.msra.mxu0 %v242
  %577 = vmatprep.subr.mxu0 %v245
  %578 = vmatpush1.msra.mxu0 %v244
  %579 = vmatprep.subr.mxu0 %v247
  %580 = vmatpush1.msra.mxu0 %v246
  %581 = vmatprep.subr.mxu0 %v249
  %582 = vmatpush1.msra.mxu0 %v248
  %583 = vmatprep.subr.mxu0 %v251
  %584 = vmatpush1.msra.mxu0 %v250
  %585 = vmatprep.subr.mxu0 %v253
  %586 = vmatpush1.msra.mxu0 %v252
  %587 = vmatprep.subr.mxu0 %v255
  %588 = vmatpush1.msra.mxu0 %v254
  %589 = vmatprep.subr.mxu0 %v257
  %590 = vmatpush1.msra.mxu0 %v256
  %591 = vmatprep.subr.mxu0 %v259
  %592 = vmatpush1.msra.mxu0 %v258
  %593 = vmatprep.subr.mxu0 %v261
  %594 = vmatpush1.msra.mxu0 %v260
  %595 = vmatprep.subr.mxu0 %v263
  %596 = vmatpush1.msra.mxu0 %v262
  %597 = vmatprep.subr.mxu0 %v265
  %598 = vmatpush1.msra.mxu0 %v264
  %599 = vmatprep.subr.mxu0 %v267
  %600 = vmatpush1.msra.mxu0 %v266
  %601 = vmatprep.subr.mxu0 %v269
  %602 = vmatpush1.msra.mxu0 %v268
  %603 = vmatprep.subr.mxu0 %v271
  %604 = vmatpush1.msra.mxu0 %v270
  %605 = vmatprep.mubr.f32.mxu0 %v35
  %606 = vmatmul.mubr.f32.gmra.mrb[0].mxu0 %v34
  %v607 = vpop.f32.mrb[0].mxu0
  %v608 = vadd.f32 %v447, %v607
  %v609 = vpop.f32.mrb[0].mxu0
  %v610 = vadd.f32 %v449, %v609
  %611 = vmatprep.mubr.f32.mxu0 %v42
  %612 = vmatmul.mubr.f32.gmra.mrb[0].mxu0 %v41
  %v613 = vpop.f32.mrb[0].mxu0
  %v614 = vadd.f32 %v453, %v613
  %v615 = vpop.f32.mrb[0].mxu0
  %v616 = vadd.f32 %v455, %v615
  %617 = vmatprep.mubr.f32.mxu0 %v49
  %618 = vmatmul.mubr.f32.gmra.mrb[0].mxu0 %v48
  %v619 = vpop.f32.mrb[0].mxu0
  %v620 = vadd.f32 %v459, %v619
  %v621 = vpop.f32.mrb[0].mxu0
  %v622 = vadd.f32 %v461, %v621
  %623 = vmatprep.mubr.f32.mxu0 %v56
  %624 = vmatmul.mubr.f32.gmra.mrb[0].mxu0 %v55
  %v625 = vpop.f32.mrb[0].mxu0
  %v626 = vadd.f32 %v465, %v625
  %v627 = vpop.f32.mrb[0].mxu0
  %v628 = vadd.f32 %v467, %v627
  %629 = vmatprep.mubr.f32.mxu0 %v63
  %630 = vmatmul.mubr.f32.gmra.mrb[0].mxu0 %v62
  %v631 = vpop.f32.mrb[0].mxu0
  %v632 = vadd.f32 %v471, %v631
  %v633 = vpop.f32.mrb[0].mxu0
  %v634 = vadd.f32 %v473, %v633
  %635 = vmatprep.mubr.f32.mxu0 %v70
  %636 = vmatmul.mubr.f32.gmra.mrb[0].mxu0 %v69
  %v637 = vpop.f32.mrb[0].mxu0
  %v638 = vadd.f32 %v477, %v637
  %v639 = vpop.f32.mrb[0].mxu0
  %v640 = vadd.f32 %v479, %v639
  %641 = vmatprep.mubr.f32.mxu0 %v77
  %642 = vmatmul.mubr.f32.gmra.mrb[0].mxu0 %v76
  %v643 = vpop.f32.mrb[0].mxu0
  %v644 = vadd.f32 %v483, %v643
  %v645 = vpop.f32.mrb[0].mxu0
  %v646 = vadd.f32 %v485, %v645
  %647 = vmatprep.mubr.f32.mxu0 %v84
  %648 = vmatmul.mubr.f32.gmra.mrb[0].mxu0 %v83
  %v649 = vpop.f32.mrb[0].mxu0
  %v650 = vadd.f32 %v489, %v649
  %v651 = vpop.f32.mrb[0].mxu0
  %v652 = vadd.f32 %v491, %v651
  %653 = vmatprep.mubr.f32.mxu0 %v91
  %654 = vmatmul.mubr.f32.gmra.mrb[0].mxu0 %v90
  %v655 = vpop.f32.mrb[0].mxu0
  %v656 = vadd.f32 %v495, %v655
  %v657 = vpop.f32.mrb[0].mxu0
  %v658 = vadd.f32 %v497, %v657
  %659 = vmatprep.mubr.f32.mxu0 %v98
  %660 = vmatmul.mubr.f32.gmra.mrb[0].mxu0 %v97
  %v661 = vpop.f32.mrb[0].mxu0
  %v662 = vadd.f32 %v501, %v661
  %v663 = vpop.f32.mrb[0].mxu0
  %v664 = vadd.f32 %v503, %v663
  %665 = vmatprep.mubr.f32.mxu0 %v105
  %666 = vmatmul.mubr.f32.gmra.mrb[0].mxu0 %v104
  %v667 = vpop.f32.mrb[0].mxu0
  %v668 = vadd.f32 %v507, %v667
  %v669 = vpop.f32.mrb[0].mxu0
  %v670 = vadd.f32 %v509, %v669
  %671 = vmatprep.mubr.f32.mxu0 %v112
  %672 = vmatmul.mubr.f32.gmra.mrb[0].mxu0 %v111
  %v673 = vpop.f32.mrb[0].mxu0
  %v674 = vadd.f32 %v513, %v673
  %v675 = vpop.f32.mrb[0].mxu0
  %v676 = vadd.f32 %v515, %v675
  %677 = vmatprep.mubr.f32.mxu0 %v119
  %678 = vmatmul.mubr.f32.gmra.mrb[0].mxu0 %v118
  %v679 = vpop.f32.mrb[0].mxu0
  %v680 = vadd.f32 %v519, %v679
  %v681 = vpop.f32.mrb[0].mxu0
  %v682 = vadd.f32 %v521, %v681
  %683 = vmatprep.mubr.f32.mxu0 %v126
  %684 = vmatmul.mubr.f32.gmra.mrb[0].mxu0 %v125
  %v685 = vpop.f32.mrb[0].mxu0
  %v686 = vadd.f32 %v525, %v685
  %v687 = vpop.f32.mrb[0].mxu0
  %v688 = vadd.f32 %v527, %v687
  %689 = vmatprep.mubr.f32.mxu0 %v133
  %690 = vmatmul.mubr.f32.gmra.mrb[0].mxu0 %v132
  %v691 = vpop.f32.mrb[0].mxu0
  %v692 = vadd.f32 %v531, %v691
  %v693 = vpop.f32.mrb[0].mxu0
  %v694 = vadd.f32 %v533, %v693
  %695 = vmatprep.mubr.f32.mxu0 %v140
  %696 = vmatmul.mubr.f32.gmra.mrb[0].mxu0 %v139
  %v697 = vpop.f32.mrb[0].mxu0
  %v698 = vadd.f32 %v537, %v697
  %v699 = vpop.f32.mrb[0].mxu0
  %v700 = vadd.f32 %v539, %v699
  %701 = vdwg.mxu0
  %702 = vmatprep.subr.mxu0 %v273
  %703 = vmatpush1.msra.mxu0 %v272
  %704 = vmatprep.subr.mxu0 %v275
  %705 = vmatpush1.msra.mxu0 %v274
  %706 = vmatprep.subr.mxu0 %v277
  %707 = vmatpush1.msra.mxu0 %v276
  %708 = vmatprep.subr.mxu0 %v279
  %709 = vmatpush1.msra.mxu0 %v278
  %710 = vmatprep.subr.mxu0 %v281
  %711 = vmatpush1.msra.mxu0 %v280
  %712 = vmatprep.subr.mxu0 %v283
  %713 = vmatpush1.msra.mxu0 %v282
  %714 = vmatprep.subr.mxu0 %v285
  %715 = vmatpush1.msra.mxu0 %v284
  %716 = vmatprep.subr.mxu0 %v287
  %717 = vmatpush1.msra.mxu0 %v286
  %718 = vmatprep.subr.mxu0 %v289
  %719 = vmatpush1.msra.mxu0 %v288
  %720 = vmatprep.subr.mxu0 %v291
  %721 = vmatpush1.msra.mxu0 %v290
  %722 = vmatprep.subr.mxu0 %v293
  %723 = vmatpush1.msra.mxu0 %v292
  %724 = vmatprep.subr.mxu0 %v295
  %725 = vmatpush1.msra.mxu0 %v294
  %726 = vmatprep.subr.mxu0 %v297
  %727 = vmatpush1.msra.mxu0 %v296
  %728 = vmatprep.subr.mxu0 %v299
  %729 = vmatpush1.msra.mxu0 %v298
  %730 = vmatprep.subr.mxu0 %v301
  %731 = vmatpush1.msra.mxu0 %v300
  %732 = vmatprep.subr.mxu0 %v303
  %733 = vmatpush1.msra.mxu0 %v302
  %734 = vmatprep.subr.mxu0 %v305
  %735 = vmatpush1.msra.mxu0 %v304
  %736 = vmatprep.subr.mxu0 %v307
  %737 = vmatpush1.msra.mxu0 %v306
  %738 = vmatprep.subr.mxu0 %v309
  %739 = vmatpush1.msra.mxu0 %v308
  %740 = vmatprep.subr.mxu0 %v311
  %741 = vmatpush1.msra.mxu0 %v310
  %742 = vmatprep.subr.mxu0 %v313
  %743 = vmatpush1.msra.mxu0 %v312
  %744 = vmatprep.subr.mxu0 %v315
  %745 = vmatpush1.msra.mxu0 %v314
  %746 = vmatprep.subr.mxu0 %v317
  %747 = vmatpush1.msra.mxu0 %v316
  %748 = vmatprep.subr.mxu0 %v319
  %749 = vmatpush1.msra.mxu0 %v318
  %750 = vmatprep.subr.mxu0 %v321
  %751 = vmatpush1.msra.mxu0 %v320
  %752 = vmatprep.subr.mxu0 %v323
  %753 = vmatpush1.msra.mxu0 %v322
  %754 = vmatprep.subr.mxu0 %v325
  %755 = vmatpush1.msra.mxu0 %v324
  %756 = vmatprep.subr.mxu0 %v327
  %757 = vmatpush1.msra.mxu0 %v326
  %758 = vmatprep.subr.mxu0 %v329
  %759 = vmatpush1.msra.mxu0 %v328
  %760 = vmatprep.subr.mxu0 %v331
  %761 = vmatpush1.msra.mxu0 %v330
  %762 = vmatprep.subr.mxu0 %v333
  %763 = vmatpush1.msra.mxu0 %v332
  %764 = vmatprep.subr.mxu0 %v335
  %765 = vmatpush1.msra.mxu0 %v334
  %766 = vmatprep.mubr.f32.mxu0 %v37
  %767 = vmatmul.mubr.f32.gmra.mrb[0].mxu0 %v36
  %v768 = vpop.f32.mrb[0].mxu0
  %v769 = vadd.f32 %v608, %v768
  %v770 = vpop.f32.mrb[0].mxu0
  %v771 = vadd.f32 %v610, %v770
  %772 = vmatprep.mubr.f32.mxu0 %v44
  %773 = vmatmul.mubr.f32.gmra.mrb[0].mxu0 %v43
  %v774 = vpop.f32.mrb[0].mxu0
  %v775 = vadd.f32 %v614, %v774
  %v776 = vpop.f32.mrb[0].mxu0
  %v777 = vadd.f32 %v616, %v776
  %778 = vmatprep.mubr.f32.mxu0 %v51
  %779 = vmatmul.mubr.f32.gmra.mrb[0].mxu0 %v50
  %v780 = vpop.f32.mrb[0].mxu0
  %v781 = vadd.f32 %v620, %v780
  %v782 = vpop.f32.mrb[0].mxu0
  %v783 = vadd.f32 %v622, %v782
  %784 = vmatprep.mubr.f32.mxu0 %v58
  %785 = vmatmul.mubr.f32.gmra.mrb[0].mxu0 %v57
  %v786 = vpop.f32.mrb[0].mxu0
  %v787 = vadd.f32 %v626, %v786
  %v788 = vpop.f32.mrb[0].mxu0
  %v789 = vadd.f32 %v628, %v788
  %790 = vmatprep.mubr.f32.mxu0 %v65
  %791 = vmatmul.mubr.f32.gmra.mrb[0].mxu0 %v64
  %v792 = vpop.f32.mrb[0].mxu0
  %v793 = vadd.f32 %v632, %v792
  %v794 = vpop.f32.mrb[0].mxu0
  %v795 = vadd.f32 %v634, %v794
  %796 = vmatprep.mubr.f32.mxu0 %v72
  %797 = vmatmul.mubr.f32.gmra.mrb[0].mxu0 %v71
  %v798 = vpop.f32.mrb[0].mxu0
  %v799 = vadd.f32 %v638, %v798
  %v800 = vpop.f32.mrb[0].mxu0
  %v801 = vadd.f32 %v640, %v800
  %802 = vmatprep.mubr.f32.mxu0 %v79
  %803 = vmatmul.mubr.f32.gmra.mrb[0].mxu0 %v78
  %v804 = vpop.f32.mrb[0].mxu0
  %v805 = vadd.f32 %v644, %v804
  %v806 = vpop.f32.mrb[0].mxu0
  %v807 = vadd.f32 %v646, %v806
  %808 = vmatprep.mubr.f32.mxu0 %v86
  %809 = vmatmul.mubr.f32.gmra.mrb[0].mxu0 %v85
  %v810 = vpop.f32.mrb[0].mxu0
  %v811 = vadd.f32 %v650, %v810
  %v812 = vpop.f32.mrb[0].mxu0
  %v813 = vadd.f32 %v652, %v812
  %814 = vmatprep.mubr.f32.mxu0 %v93
  %815 = vmatmul.mubr.f32.gmra.mrb[0].mxu0 %v92
  %v816 = vpop.f32.mrb[0].mxu0
  %v817 = vadd.f32 %v656, %v816
  %v818 = vpop.f32.mrb[0].mxu0
  %v819 = vadd.f32 %v658, %v818
  %820 = vmatprep.mubr.f32.mxu0 %v100
  %821 = vmatmul.mubr.f32.gmra.mrb[0].mxu0 %v99
  %v822 = vpop.f32.mrb[0].mxu0
  %v823 = vadd.f32 %v662, %v822
  %v824 = vpop.f32.mrb[0].mxu0
  %v825 = vadd.f32 %v664, %v824
  %826 = vmatprep.mubr.f32.mxu0 %v107
  %827 = vmatmul.mubr.f32.gmra.mrb[0].mxu0 %v106
  %v828 = vpop.f32.mrb[0].mxu0
  %v829 = vadd.f32 %v668, %v828
  %v830 = vpop.f32.mrb[0].mxu0
  %v831 = vadd.f32 %v670, %v830
  %832 = vmatprep.mubr.f32.mxu0 %v114
  %833 = vmatmul.mubr.f32.gmra.mrb[0].mxu0 %v113
  %v834 = vpop.f32.mrb[0].mxu0
  %v835 = vadd.f32 %v674, %v834
  %v836 = vpop.f32.mrb[0].mxu0
  %v837 = vadd.f32 %v676, %v836
  %838 = vmatprep.mubr.f32.mxu0 %v121
  %839 = vmatmul.mubr.f32.gmra.mrb[0].mxu0 %v120
  %v840 = vpop.f32.mrb[0].mxu0
  %v841 = vadd.f32 %v680, %v840
  %v842 = vpop.f32.mrb[0].mxu0
  %v843 = vadd.f32 %v682, %v842
  %844 = vmatprep.mubr.f32.mxu0 %v128
  %845 = vmatmul.mubr.f32.gmra.mrb[0].mxu0 %v127
  %v846 = vpop.f32.mrb[0].mxu0
  %v847 = vadd.f32 %v686, %v846
  %v848 = vpop.f32.mrb[0].mxu0
  %v849 = vadd.f32 %v688, %v848
  %850 = vmatprep.mubr.f32.mxu0 %v135
  %851 = vmatmul.mubr.f32.gmra.mrb[0].mxu0 %v134
  %v852 = vpop.f32.mrb[0].mxu0
  %v853 = vadd.f32 %v692, %v852
  %v854 = vpop.f32.mrb[0].mxu0
  %v855 = vadd.f32 %v694, %v854
  %856 = vmatprep.mubr.f32.mxu0 %v142
  %857 = vmatmul.mubr.f32.gmra.mrb[0].mxu0 %v141
  %v858 = vpop.f32.mrb[0].mxu0
  %v859 = vadd.f32 %v698, %v858
  %v860 = vpop.f32.mrb[0].mxu0
  %v861 = vadd.f32 %v700, %v860
  %862 = vdwg.mxu0
  %863 = vmatprep.subr.mxu0 %v337
  %864 = vmatpush1.msra.mxu0 %v336
  %865 = vmatprep.subr.mxu0 %v339
  %866 = vmatpush1.msra.mxu0 %v338
  %867 = vmatprep.subr.mxu0 %v341
  %868 = vmatpush1.msra.mxu0 %v340
  %869 = vmatprep.subr.mxu0 %v343
  %870 = vmatpush1.msra.mxu0 %v342
  %871 = vmatprep.subr.mxu0 %v345
  %872 = vmatpush1.msra.mxu0 %v344
  %873 = vmatprep.subr.mxu0 %v347
  %874 = vmatpush1.msra.mxu0 %v346
  %875 = vmatprep.subr.mxu0 %v349
  %876 = vmatpush1.msra.mxu0 %v348
  %877 = vmatprep.subr.mxu0 %v351
  %878 = vmatpush1.msra.mxu0 %v350
  %879 = vmatprep.subr.mxu0 %v353
  %880 = vmatpush1.msra.mxu0 %v352
  %881 = vmatprep.subr.mxu0 %v355
  %882 = vmatpush1.msra.mxu0 %v354
  %883 = vmatprep.subr.mxu0 %v357
  %884 = vmatpush1.msra.mxu0 %v356
  %885 = vmatprep.subr.mxu0 %v359
  %886 = vmatpush1.msra.mxu0 %v358
  %887 = vmatprep.subr.mxu0 %v361
  %888 = vmatpush1.msra.mxu0 %v360
  %889 = vmatprep.subr.mxu0 %v363
  %890 = vmatpush1.msra.mxu0 %v362
  %891 = vmatprep.subr.mxu0 %v365
  %892 = vmatpush1.msra.mxu0 %v364
  %893 = vmatprep.subr.mxu0 %v367
  %894 = vmatpush1.msra.mxu0 %v366
  %895 = vmatprep.subr.mxu0 0.0
  %896 = vmatpush1.msra.mxu0 0.0
  %897 = vmatprep.subr.mxu0 0.0
  %898 = vmatpush1.msra.mxu0 0.0
  %899 = vmatprep.subr.mxu0 0.0
  %900 = vmatpush1.msra.mxu0 0.0
  %901 = vmatprep.subr.mxu0 0.0
  %902 = vmatpush1.msra.mxu0 0.0
  %903 = vmatprep.subr.mxu0 0.0
  %904 = vmatpush1.msra.mxu0 0.0
  %905 = vmatprep.subr.mxu0 0.0
  %906 = vmatpush1.msra.mxu0 0.0
  %907 = vmatprep.subr.mxu0 0.0
  %908 = vmatpush1.msra.mxu0 0.0
  %909 = vmatprep.subr.mxu0 0.0
  %910 = vmatpush1.msra.mxu0 0.0
  %911 = vmatprep.subr.mxu0 0.0
  %912 = vmatpush1.msra.mxu0 0.0
  %913 = vmatprep.subr.mxu0 0.0
  %914 = vmatpush1.msra.mxu0 0.0
  %915 = vmatprep.subr.mxu0 0.0
  %916 = vmatpush1.msra.mxu0 0.0
  %917 = vmatprep.subr.mxu0 0.0
  %918 = vmatpush1.msra.mxu0 0.0
  %919 = vmatprep.subr.mxu0 0.0
  %920 = vmatpush1.msra.mxu0 0.0
  %921 = vmatprep.subr.mxu0 0.0
  %922 = vmatpush1.msra.mxu0 0.0
  %923 = vmatprep.subr.mxu0 0.0
  %924 = vmatpush1.msra.mxu0 0.0
  %925 = vmatprep.subr.mxu0 0.0
  %926 = vmatpush1.msra.mxu0 0.0
  %927 = vmatprep.mubr.f32.mxu0 0.0
  %928 = vmatmul.mubr.f32.gmra.mrb[0].mxu0 %v38
  %v929 = vpop.f32.mrb[0].mxu0
  %v930 = vadd.f32 %v769, %v929
  %v931 = vpop.f32.mrb[0].mxu0
  %v932 = vadd.f32 %v771, %v931
  %933 = vmatprep.mubr.f32.mxu0 0.0
  %934 = vmatmul.mubr.f32.gmra.mrb[0].mxu0 %v45
  %v935 = vpop.f32.mrb[0].mxu0
  %v936 = vadd.f32 %v775, %v935
  %v937 = vpop.f32.mrb[0].mxu0
  %v938 = vadd.f32 %v777, %v937
  %939 = vmatprep.mubr.f32.mxu0 0.0
  %940 = vmatmul.mubr.f32.gmra.mrb[0].mxu0 %v52
  %v941 = vpop.f32.mrb[0].mxu0
  %v942 = vadd.f32 %v781, %v941
  %v943 = vpop.f32.mrb[0].mxu0
  %v944 = vadd.f32 %v783, %v943
  %945 = vmatprep.mubr.f32.mxu0 0.0
  %946 = vmatmul.mubr.f32.gmra.mrb[0].mxu0 %v59
  %v947 = vpop.f32.mrb[0].mxu0
  %v948 = vadd.f32 %v787, %v947
  %v949 = vpop.f32.mrb[0].mxu0
  %v950 = vadd.f32 %v789, %v949
  %951 = vmatprep.mubr.f32.mxu0 0.0
  %952 = vmatmul.mubr.f32.gmra.mrb[0].mxu0 %v66
  %v953 = vpop.f32.mrb[0].mxu0
  %v954 = vadd.f32 %v793, %v953
  %v955 = vpop.f32.mrb[0].mxu0
  %v956 = vadd.f32 %v795, %v955
  %957 = vmatprep.mubr.f32.mxu0 0.0
  %958 = vmatmul.mubr.f32.gmra.mrb[0].mxu0 %v73
  %v959 = vpop.f32.mrb[0].mxu0
  %v960 = vadd.f32 %v799, %v959
  %v961 = vpop.f32.mrb[0].mxu0
  %v962 = vadd.f32 %v801, %v961
  %963 = vmatprep.mubr.f32.mxu0 0.0
  %964 = vmatmul.mubr.f32.gmra.mrb[0].mxu0 %v80
  %v965 = vpop.f32.mrb[0].mxu0
  %v966 = vadd.f32 %v805, %v965
  %v967 = vpop.f32.mrb[0].mxu0
  %v968 = vadd.f32 %v807, %v967
  %969 = vmatprep.mubr.f32.mxu0 0.0
  %970 = vmatmul.mubr.f32.gmra.mrb[0].mxu0 %v87
  %v971 = vpop.f32.mrb[0].mxu0
  %v972 = vadd.f32 %v811, %v971
  %v973 = vpop.f32.mrb[0].mxu0
  %v974 = vadd.f32 %v813, %v973
  %975 = vmatprep.mubr.f32.mxu0 0.0
  %976 = vmatmul.mubr.f32.gmra.mrb[0].mxu0 %v94
  %v977 = vpop.f32.mrb[0].mxu0
  %v978 = vadd.f32 %v817, %v977
  %v979 = vpop.f32.mrb[0].mxu0
  %v980 = vadd.f32 %v819, %v979
  %981 = vmatprep.mubr.f32.mxu0 0.0
  %982 = vmatmul.mubr.f32.gmra.mrb[0].mxu0 %v101
  %v983 = vpop.f32.mrb[0].mxu0
  %v984 = vadd.f32 %v823, %v983
  %v985 = vpop.f32.mrb[0].mxu0
  %v986 = vadd.f32 %v825, %v985
  %987 = vmatprep.mubr.f32.mxu0 0.0
  %988 = vmatmul.mubr.f32.gmra.mrb[0].mxu0 %v108
  %v989 = vpop.f32.mrb[0].mxu0
  %v990 = vadd.f32 %v829, %v989
  %v991 = vpop.f32.mrb[0].mxu0
  %v992 = vadd.f32 %v831, %v991
  %993 = vmatprep.mubr.f32.mxu0 0.0
  %994 = vmatmul.mubr.f32.gmra.mrb[0].mxu0 %v115
  %v995 = vpop.f32.mrb[0].mxu0
  %v996 = vadd.f32 %v835, %v995
  %v997 = vpop.f32.mrb[0].mxu0
  %v998 = vadd.f32 %v837, %v997
  %999 = vmatprep.mubr.f32.mxu0 0.0
  %1000 = vmatmul.mubr.f32.gmra.mrb[0].mxu0 %v122
  %v1001 = vpop.f32.mrb[0].mxu0
  %v1002 = vadd.f32 %v841, %v1001
  %v1003 = vpop.f32.mrb[0].mxu0
  %v1004 = vadd.f32 %v843, %v1003
  %1005 = vmatprep.mubr.f32.mxu0 0.0
  %1006 = vmatmul.mubr.f32.gmra.mrb[0].mxu0 %v129
  %v1007 = vpop.f32.mrb[0].mxu0
  %v1008 = vadd.f32 %v847, %v1007
  %v1009 = vpop.f32.mrb[0].mxu0
  %v1010 = vadd.f32 %v849, %v1009
  %1011 = vmatprep.mubr.f32.mxu0 0.0
  %1012 = vmatmul.mubr.f32.gmra.mrb[0].mxu0 %v136
  %v1013 = vpop.f32.mrb[0].mxu0
  %v1014 = vadd.f32 %v853, %v1013
  %v1015 = vpop.f32.mrb[0].mxu0
  %v1016 = vadd.f32 %v855, %v1015
  %1017 = vmatprep.mubr.f32.mxu0 0.0
  %1018 = vmatmul.mubr.f32.gmra.mrb[0].mxu0 %v143
  %v1019 = vpop.f32.mrb[0].mxu0
  %v1020 = vadd.f32 %v859, %v1019
  %v1021 = vpop.f32.mrb[0].mxu0
  %v1022 = vadd.f32 %v861, %v1021
  %1023 = vdwg.mxu0
  %v1024 = vmax.f32 %v930, 0.0
  %v1025 = vmax.f32 %v932, 0.0
  %v1026 = vmax.f32 %v936, 0.0
  %v1027 = vmax.f32 %v938, 0.0
  %v1028 = vmax.f32 %v942, 0.0
  %v1029 = vmax.f32 %v944, 0.0
  %v1030 = vmax.f32 %v948, 0.0
  %v1031 = vmax.f32 %v950, 0.0
  %v1032 = vmax.f32 %v954, 0.0
  %v1033 = vmax.f32 %v956, 0.0
  %v1034 = vmax.f32 %v960, 0.0
  %v1035 = vmax.f32 %v962, 0.0
  %v1036 = vmax.f32 %v966, 0.0
  %v1037 = vmax.f32 %v968, 0.0
  %v1038 = vmax.f32 %v972, 0.0
  %v1039 = vmax.f32 %v974, 0.0
  %v1040 = vmax.f32 %v978, 0.0
  %v1041 = vmax.f32 %v980, 0.0
  %v1042 = vmax.f32 %v984, 0.0
  %v1043 = vmax.f32 %v986, 0.0
  %v1044 = vmax.f32 %v990, 0.0
  %v1045 = vmax.f32 %v992, 0.0
  %v1046 = vmax.f32 %v996, 0.0
  %v1047 = vmax.f32 %v998, 0.0
  %v1048 = vmax.f32 %v1002, 0.0
  %v1049 = vmax.f32 %v1004, 0.0
  %v1050 = vmax.f32 %v1008, 0.0
  %v1051 = vmax.f32 %v1010, 0.0
  %v1052 = vmax.f32 %v1014, 0.0
  %v1053 = vmax.f32 %v1016, 0.0
  %v1054 = vmax.f32 %v1020, 0.0
  %v1055 = vmax.f32 %v1022, 0.0
  %v1056 = vld [vmem:[%s3] sm:$0xff]
  %v1057 = vld [vmem:[%s3 + $0x8] sm:$0xff]
  %v1058 = vld [vmem:[%s3 + $0x10] sm:$0xff]
  %v1059 = vld [vmem:[%s3 + $0x18] sm:$0xff]
  %v1060 = vld [vmem:[%s3 + $0x20] sm:$0xff]
  %v1061 = vld [vmem:[%s3 + $0x28] sm:$0xff]
  %v1062 = vld [vmem:[%s3 + $0x30] sm:$0xff]
  %v1063 = vld [vmem:[%s3 + $0x38] sm:$0xff]
  %v1064 = vld [vmem:[%s3 + $0x40] sm:$0xff]
  %v1065 = vld [vmem:[%s3 + $0x48] sm:$0xff]
  %v1066 = vld [vmem:[%s3 + $0x50] sm:$0xff]
  %v1067 = vld [vmem:[%s3 + $0x58] sm:$0xff]
  %v1068 = vld [vmem:[%s3 + $0x60] sm:$0xff]
  %v1069 = vld [vmem:[%s3 + $0x68] sm:$0xff]
  %v1070 = vld [vmem:[%s3 + $0x70] sm:$0xff]
  %v1071 = vld [vmem:[%s3 + $0x78] sm:$0xff]
  %v1072 = vld [vmem:[%s3 + $0x80] sm:$0xff]
  %v1073 = vld [vmem:[%s3 + $0x88] sm:$0xff]
  %v1074 = vld [vmem:[%s3 + $0x90] sm:$0xff]
  %v1075 = vld [vmem:[%s3 + $0x98] sm:$0xff]
  %v1076 = vld [vmem:[%s3 + $0xa0] sm:$0xff]
  %v1077 = vld [vmem:[%s3 + $0xa8] sm:$0xff]
  %v1078 = vld [vmem:[%s3 + $0xb0] sm:$0xff]
  %v1079 = vld [vmem:[%s3 + $0xb8] sm:$0xff]
  %v1080 = vld [vmem:[%s3 + $0xc0] sm:$0xff]
  %v1081 = vld [vmem:[%s3 + $0xc8] sm:$0xff]
  %v1082 = vld [vmem:[%s3 + $0xd0] sm:$0xff]
  %v1083 = vld [vmem:[%s3 + $0xd8] sm:$0xff]
  %v1084 = vld [vmem:[%s3 + $0xe0] sm:$0xff]
  %v1085 = vld [vmem:[%s3 + $0xe8] sm:$0xff]
  %v1086 = vld [vmem:[%s3 + $0xf0] sm:$0xff]
  %v1087 = vld [vmem:[%s3 + $0xf8] sm:$0xff]
  %v1088 = vld [vmem:[%s4] sm:$0x1]
  %v1090 = vlaneseq
  %v1091 = vshrl.u32 %v1090, 7
  %v1092 = vsub.s32 0, %v1091
  %v1093 = vrot.slane %v1088, %v1092
  %1095 = vmatprep.subr.mxu0 0.0
  %1096 = vmatpush1.msra.mxu0 %v1056
  %1097 = vmatprep.subr.mxu0 0.0
  %1098 = vmatpush1.msra.mxu0 %v1057
  %1099 = vmatprep.subr.mxu0 0.0
  %1100 = vmatpush1.msra.mxu0 %v1058
  %1101 = vmatprep.subr.mxu0 0.0
  %1102 = vmatpush1.msra.mxu0 %v1059
  %1103 = vmatprep.subr.mxu0 0.0
  %1104 = vmatpush1.msra.mxu0 %v1060
  %1105 = vmatprep.subr.mxu0 0.0
  %1106 = vmatpush1.msra.mxu0 %v1061
  %1107 = vmatprep.subr.mxu0 0.0
  %1108 = vmatpush1.msra.mxu0 %v1062
  %1109 = vmatprep.subr.mxu0 0.0
  %1110 = vmatpush1.msra.mxu0 %v1063
  %1111 = vmatprep.subr.mxu0 0.0
  %1112 = vmatpush1.msra.mxu0 %v1064
  %1113 = vmatprep.subr.mxu0 0.0
  %1114 = vmatpush1.msra.mxu0 %v1065
  %1115 = vmatprep.subr.mxu0 0.0
  %1116 = vmatpush1.msra.mxu0 %v1066
  %1117 = vmatprep.subr.mxu0 0.0
  %1118 = vmatpush1.msra.mxu0 %v1067
  %1119 = vmatprep.subr.mxu0 0.0
  %1120 = vmatpush1.msra.mxu0 %v1068
  %1121 = vmatprep.subr.mxu0 0.0
  %1122 = vmatpush1.msra.mxu0 %v1069
  %1123 = vmatprep.subr.mxu0 0.0
  %1124 = vmatpush1.msra.mxu0 %v1070
  %1125 = vmatprep.subr.mxu0 0.0
  %1126 = vmatpush1.msra.mxu0 %v1071
  %1127 = vmatprep.subr.mxu0 0.0
  %1128 = vmatpush1.msra.mxu0 %v1072
  %1129 = vmatprep.subr.mxu0 0.0
  %1130 = vmatpush1.msra.mxu0 %v1073
  %1131 = vmatprep.subr.mxu0 0.0
  %1132 = vmatpush1.msra.mxu0 %v1074
  %1133 = vmatprep.subr.mxu0 0.0
  %1134 = vmatpush1.msra.mxu0 %v1075
  %1135 = vmatprep.subr.mxu0 0.0
  %1136 = vmatpush1.msra.mxu0 %v1076
  %1137 = vmatprep.subr.mxu0 0.0
  %1138 = vmatpush1.msra.mxu0 %v1077
  %1139 = vmatprep.subr.mxu0 0.0
  %1140 = vmatpush1.msra.mxu0 %v1078
  %1141 = vmatprep.subr.mxu0 0.0
  %1142 = vmatpush1.msra.mxu0 %v1079
  %1143 = vmatprep.subr.mxu0 0.0
  %1144 = vmatpush1.msra.mxu0 %v1080
  %1145 = vmatprep.subr.mxu0 0.0
  %1146 = vmatpush1.msra.mxu0 %v1081
  %1147 = vmatprep.subr.mxu0 0.0
  %1148 = vmatpush1.msra.mxu0 %v1082
  %1149 = vmatprep.subr.mxu0 0.0
  %1150 = vmatpush1.msra.mxu0 %v1083
  %1151 = vmatprep.subr.mxu0 0.0
  %1152 = vmatpush1.msra.mxu0 %v1084
  %1153 = vmatprep.subr.mxu0 0.0
  %1154 = vmatpush1.msra.mxu0 %v1085
  %1155 = vmatprep.subr.mxu0 0.0
  %1156 = vmatpush1.msra.mxu0 %v1086
  %1157 = vmatprep.subr.mxu0 0.0
  %1158 = vmatpush1.msra.mxu0 %v1087
  %1159 = vmatprep.mubr.f32.mxu0 %v1025
  %1160 = vmatmul.mubr.f32.gmra.mrb[0].mxu0 %v1024
  %v1161 = vpop.f32.mrb[0].mxu0
  %v1162 = vadd.f32 %v1093, %v1161
  %v1163 = vpop.f32.mrb[0].mxu0
  %1164 = vmatprep.mubr.f32.mxu0 %v1027
  %1165 = vmatmul.mubr.f32.gmra.mrb[0].mxu0 %v1026
  %v1166 = vpop.f32.mrb[0].mxu0
  %v1167 = vadd.f32 %v1093, %v1166
  %v1168 = vpop.f32.mrb[0].mxu0
  %1169 = vmatprep.mubr.f32.mxu0 %v1029
  %1170 = vmatmul.mubr.f32.gmra.mrb[0].mxu0 %v1028
  %v1171 = vpop.f32.mrb[0].mxu0
  %v1172 = vadd.f32 %v1093, %v1171
  %v1173 = vpop.f32.mrb[0].mxu0
  %1174 = vmatprep.mubr.f32.mxu0 %v1031
  %1175 = vmatmul.mubr.f32.gmra.mrb[0].mxu0 %v1030
  %v1176 = vpop.f32.mrb[0].mxu0
  %v1177 = vadd.f32 %v1093, %v1176
  %v1178 = vpop.f32.mrb[0].mxu0
  %1179 = vmatprep.mubr.f32.mxu0 %v1033
  %1180 = vmatmul.mubr.f32.gmra.mrb[0].mxu0 %v1032
  %v1181 = vpop.f32.mrb[0].mxu0
  %v1182 = vadd.f32 %v1093, %v1181
  %v1183 = vpop.f32.mrb[0].mxu0
  %1184 = vmatprep.mubr.f32.mxu0 %v1035
  %1185 = vmatmul.mubr.f32.gmra.mrb[0].mxu0 %v1034
  %v1186 = vpop.f32.mrb[0].mxu0
  %v1187 = vadd.f32 %v1093, %v1186
  %v1188 = vpop.f32.mrb[0].mxu0
  %1189 = vmatprep.mubr.f32.mxu0 %v1037
  %1190 = vmatmul.mubr.f32.gmra.mrb[0].mxu0 %v1036
  %v1191 = vpop.f32.mrb[0].mxu0
  %v1192 = vadd.f32 %v1093, %v1191
  %v1193 = vpop.f32.mrb[0].mxu0
  %1194 = vmatprep.mubr.f32.mxu0 %v1039
  %1195 = vmatmul.mubr.f32.gmra.mrb[0].mxu0 %v1038
  %v1196 = vpop.f32.mrb[0].mxu0
  %v1197 = vadd.f32 %v1093, %v1196
  %v1198 = vpop.f32.mrb[0].mxu0
  %1199 = vmatprep.mubr.f32.mxu0 %v1041
  %1200 = vmatmul.mubr.f32.gmra.mrb[0].mxu0 %v1040
  %v1201 = vpop.f32.mrb[0].mxu0
  %v1202 = vadd.f32 %v1093, %v1201
  %v1203 = vpop.f32.mrb[0].mxu0
  %1204 = vmatprep.mubr.f32.mxu0 %v1043
  %1205 = vmatmul.mubr.f32.gmra.mrb[0].mxu0 %v1042
  %v1206 = vpop.f32.mrb[0].mxu0
  %v1207 = vadd.f32 %v1093, %v1206
  %v1208 = vpop.f32.mrb[0].mxu0
  %1209 = vmatprep.mubr.f32.mxu0 %v1045
  %1210 = vmatmul.mubr.f32.gmra.mrb[0].mxu0 %v1044
  %v1211 = vpop.f32.mrb[0].mxu0
  %v1212 = vadd.f32 %v1093, %v1211
  %v1213 = vpop.f32.mrb[0].mxu0
  %1214 = vmatprep.mubr.f32.mxu0 %v1047
  %1215 = vmatmul.mubr.f32.gmra.mrb[0].mxu0 %v1046
  %v1216 = vpop.f32.mrb[0].mxu0
  %v1217 = vadd.f32 %v1093, %v1216
  %v1218 = vpop.f32.mrb[0].mxu0
  %1219 = vmatprep.mubr.f32.mxu0 %v1049
  %1220 = vmatmul.mubr.f32.gmra.mrb[0].mxu0 %v1048
  %v1221 = vpop.f32.mrb[0].mxu0
  %v1222 = vadd.f32 %v1093, %v1221
  %v1223 = vpop.f32.mrb[0].mxu0
  %1224 = vmatprep.mubr.f32.mxu0 %v1051
  %1225 = vmatmul.mubr.f32.gmra.mrb[0].mxu0 %v1050
  %v1226 = vpop.f32.mrb[0].mxu0
  %v1227 = vadd.f32 %v1093, %v1226
  %v1228 = vpop.f32.mrb[0].mxu0
  %1229 = vmatprep.mubr.f32.mxu0 %v1053
  %1230 = vmatmul.mubr.f32.gmra.mrb[0].mxu0 %v1052
  %v1231 = vpop.f32.mrb[0].mxu0
  %v1232 = vadd.f32 %v1093, %v1231
  %v1233 = vpop.f32.mrb[0].mxu0
  %1234 = vmatprep.mubr.f32.mxu0 %v1055
  %1235 = vmatmul.mubr.f32.gmra.mrb[0].mxu0 %v1054
  %v1236 = vpop.f32.mrb[0].mxu0
  %v1237 = vadd.f32 %v1093, %v1236
  %v1238 = vpop.f32.mrb[0].mxu0
  %1239 = vdwg.mxu0
  %v1240 = vmax.f32 %v1162, 0.0
  %v1241 = vmax.f32 %v1167, 0.0
  %v1242 = vmax.f32 %v1172, 0.0
  %v1243 = vmax.f32 %v1177, 0.0
  %v1244 = vmax.f32 %v1182, 0.0
  %v1245 = vmax.f32 %v1187, 0.0
  %v1246 = vmax.f32 %v1192, 0.0
  %v1247 = vmax.f32 %v1197, 0.0
  %v1248 = vmax.f32 %v1202, 0.0
  %v1249 = vmax.f32 %v1207, 0.0
  %v1250 = vmax.f32 %v1212, 0.0
  %v1251 = vmax.f32 %v1217, 0.0
  %v1252 = vmax.f32 %v1222, 0.0
  %v1253 = vmax.f32 %v1227, 0.0
  %v1254 = vmax.f32 %v1232, 0.0
  %v1255 = vmax.f32 %v1237, 0.0
  %v1256 = vld [vmem:[%s5] sm:$0xff]
  %v1257 = vld [vmem:[%s5 + $0x8] sm:$0xff]
  %v1258 = vld [vmem:[%s5 + $0x10] sm:$0xff]
  %v1259 = vld [vmem:[%s5 + $0x18] sm:$0xff]
  %v1260 = vld [vmem:[%s5 + $0x20] sm:$0xff]
  %v1261 = vld [vmem:[%s5 + $0x28] sm:$0xff]
  %v1262 = vld [vmem:[%s5 + $0x30] sm:$0xff]
  %v1263 = vld [vmem:[%s5 + $0x38] sm:$0xff]
  %v1264 = vld [vmem:[%s5 + $0x40] sm:$0xff]
  %v1265 = vld [vmem:[%s5 + $0x48] sm:$0xff]
  %v1266 = vld [vmem:[%s5 + $0x50] sm:$0xff]
  %v1267 = vld [vmem:[%s5 + $0x58] sm:$0xff]
  %v1268 = vld [vmem:[%s5 + $0x60] sm:$0xff]
  %v1269 = vld [vmem:[%s5 + $0x68] sm:$0xff]
  %v1270 = vld [vmem:[%s5 + $0x70] sm:$0xff]
  %v1271 = vld [vmem:[%s5 + $0x78] sm:$0xff]
  %v1272 = vld [vmem:[%s6] sm:$0x1]
  %v1274 = vlaneseq
  %v1275 = vshrl.u32 %v1274, 7
  %v1276 = vsub.s32 0, %v1275
  %v1277 = vrot.slane %v1272, %v1276
  %1279 = vmatprep.subr.mxu0 0.0
  %1280 = vmatpush1.msra.mxu0 %v1256
  %1281 = vmatprep.subr.mxu0 0.0
  %1282 = vmatpush1.msra.mxu0 %v1257
  %1283 = vmatprep.subr.mxu0 0.0
  %1284 = vmatpush1.msra.mxu0 %v1258
  %1285 = vmatprep.subr.mxu0 0.0
  %1286 = vmatpush1.msra.mxu0 %v1259
  %1287 = vmatprep.subr.mxu0 0.0
  %1288 = vmatpush1.msra.mxu0 %v1260
  %1289 = vmatprep.subr.mxu0 0.0
  %1290 = vmatpush1.msra.mxu0 %v1261
  %1291 = vmatprep.subr.mxu0 0.0
  %1292 = vmatpush1.msra.mxu0 %v1262
  %1293 = vmatprep.subr.mxu0 0.0
  %1294 = vmatpush1.msra.mxu0 %v1263
  %1295 = vmatprep.subr.mxu0 0.0
  %1296 = vmatpush1.msra.mxu0 %v1264
  %1297 = vmatprep.subr.mxu0 0.0
  %1298 = vmatpush1.msra.mxu0 %v1265
  %1299 = vmatprep.subr.mxu0 0.0
  %1300 = vmatpush1.msra.mxu0 %v1266
  %1301 = vmatprep.subr.mxu0 0.0
  %1302 = vmatpush1.msra.mxu0 %v1267
  %1303 = vmatprep.subr.mxu0 0.0
  %1304 = vmatpush1.msra.mxu0 %v1268
  %1305 = vmatprep.subr.mxu0 0.0
  %1306 = vmatpush1.msra.mxu0 %v1269
  %1307 = vmatprep.subr.mxu0 0.0
  %1308 = vmatpush1.msra.mxu0 %v1270
  %1309 = vmatprep.subr.mxu0 0.0
  %1310 = vmatpush1.msra.mxu0 %v1271
  %1311 = vmatprep.subr.mxu0 0.0
  %1312 = vmatpush1.msra.mxu0 0.0
  %1313 = vmatprep.subr.mxu0 0.0
  %1314 = vmatpush1.msra.mxu0 0.0
  %1315 = vmatprep.subr.mxu0 0.0
  %1316 = vmatpush1.msra.mxu0 0.0
  %1317 = vmatprep.subr.mxu0 0.0
  %1318 = vmatpush1.msra.mxu0 0.0
  %1319 = vmatprep.subr.mxu0 0.0
  %1320 = vmatpush1.msra.mxu0 0.0
  %1321 = vmatprep.subr.mxu0 0.0
  %1322 = vmatpush1.msra.mxu0 0.0
  %1323 = vmatprep.subr.mxu0 0.0
  %1324 = vmatpush1.msra.mxu0 0.0
  %1325 = vmatprep.subr.mxu0 0.0
  %1326 = vmatpush1.msra.mxu0 0.0
  %1327 = vmatprep.subr.mxu0 0.0
  %1328 = vmatpush1.msra.mxu0 0.0
  %1329 = vmatprep.subr.mxu0 0.0
  %1330 = vmatpush1.msra.mxu0 0.0
  %1331 = vmatprep.subr.mxu0 0.0
  %1332 = vmatpush1.msra.mxu0 0.0
  %1333 = vmatprep.subr.mxu0 0.0
  %1334 = vmatpush1.msra.mxu0 0.0
  %1335 = vmatprep.subr.mxu0 0.0
  %1336 = vmatpush1.msra.mxu0 0.0
  %1337 = vmatprep.subr.mxu0 0.0
  %1338 = vmatpush1.msra.mxu0 0.0
  %1339 = vmatprep.subr.mxu0 0.0
  %1340 = vmatpush1.msra.mxu0 0.0
  %1341 = vmatprep.subr.mxu0 0.0
  %1342 = vmatpush1.msra.mxu0 0.0
  %1343 = vmatprep.mubr.f32.mxu0 0.0
  %1344 = vmatmul.mubr.f32.gmra.mrb[0].mxu0 %v1240
  %v1345 = vpop.f32.mrb[0].mxu0
  %v1346 = vadd.f32 %v1277, %v1345
  %v1347 = vpop.f32.mrb[0].mxu0
  %1348 = vmatprep.mubr.f32.mxu0 0.0
  %1349 = vmatmul.mubr.f32.gmra.mrb[0].mxu0 %v1241
  %v1350 = vpop.f32.mrb[0].mxu0
  %v1351 = vadd.f32 %v1277, %v1350
  %v1352 = vpop.f32.mrb[0].mxu0
  %1353 = vmatprep.mubr.f32.mxu0 0.0
  %1354 = vmatmul.mubr.f32.gmra.mrb[0].mxu0 %v1242
  %v1355 = vpop.f32.mrb[0].mxu0
  %v1356 = vadd.f32 %v1277, %v1355
  %v1357 = vpop.f32.mrb[0].mxu0
  %1358 = vmatprep.mubr.f32.mxu0 0.0
  %1359 = vmatmul.mubr.f32.gmra.mrb[0].mxu0 %v1243
  %v1360 = vpop.f32.mrb[0].mxu0
  %v1361 = vadd.f32 %v1277, %v1360
  %v1362 = vpop.f32.mrb[0].mxu0
  %1363 = vmatprep.mubr.f32.mxu0 0.0
  %1364 = vmatmul.mubr.f32.gmra.mrb[0].mxu0 %v1244
  %v1365 = vpop.f32.mrb[0].mxu0
  %v1366 = vadd.f32 %v1277, %v1365
  %v1367 = vpop.f32.mrb[0].mxu0
  %1368 = vmatprep.mubr.f32.mxu0 0.0
  %1369 = vmatmul.mubr.f32.gmra.mrb[0].mxu0 %v1245
  %v1370 = vpop.f32.mrb[0].mxu0
  %v1371 = vadd.f32 %v1277, %v1370
  %v1372 = vpop.f32.mrb[0].mxu0
  %1373 = vmatprep.mubr.f32.mxu0 0.0
  %1374 = vmatmul.mubr.f32.gmra.mrb[0].mxu0 %v1246
  %v1375 = vpop.f32.mrb[0].mxu0
  %v1376 = vadd.f32 %v1277, %v1375
  %v1377 = vpop.f32.mrb[0].mxu0
  %1378 = vmatprep.mubr.f32.mxu0 0.0
  %1379 = vmatmul.mubr.f32.gmra.mrb[0].mxu0 %v1247
  %v1380 = vpop.f32.mrb[0].mxu0
  %v1381 = vadd.f32 %v1277, %v1380
  %v1382 = vpop.f32.mrb[0].mxu0
  %1383 = vmatprep.mubr.f32.mxu0 0.0
  %1384 = vmatmul.mubr.f32.gmra.mrb[0].mxu0 %v1248
  %v1385 = vpop.f32.mrb[0].mxu0
  %v1386 = vadd.f32 %v1277, %v1385
  %v1387 = vpop.f32.mrb[0].mxu0
  %1388 = vmatprep.mubr.f32.mxu0 0.0
  %1389 = vmatmul.mubr.f32.gmra.mrb[0].mxu0 %v1249
  %v1390 = vpop.f32.mrb[0].mxu0
  %v1391 = vadd.f32 %v1277, %v1390
  %v1392 = vpop.f32.mrb[0].mxu0
  %1393 = vmatprep.mubr.f32.mxu0 0.0
  %1394 = vmatmul.mubr.f32.gmra.mrb[0].mxu0 %v1250
  %v1395 = vpop.f32.mrb[0].mxu0
  %v1396 = vadd.f32 %v1277, %v1395
  %v1397 = vpop.f32.mrb[0].mxu0
  %1398 = vmatprep.mubr.f32.mxu0 0.0
  %1399 = vmatmul.mubr.f32.gmra.mrb[0].mxu0 %v1251
  %v1400 = vpop.f32.mrb[0].mxu0
  %v1401 = vadd.f32 %v1277, %v1400
  %v1402 = vpop.f32.mrb[0].mxu0
  %1403 = vmatprep.mubr.f32.mxu0 0.0
  %1404 = vmatmul.mubr.f32.gmra.mrb[0].mxu0 %v1252
  %v1405 = vpop.f32.mrb[0].mxu0
  %v1406 = vadd.f32 %v1277, %v1405
  %v1407 = vpop.f32.mrb[0].mxu0
  %1408 = vmatprep.mubr.f32.mxu0 0.0
  %1409 = vmatmul.mubr.f32.gmra.mrb[0].mxu0 %v1253
  %v1410 = vpop.f32.mrb[0].mxu0
  %v1411 = vadd.f32 %v1277, %v1410
  %v1412 = vpop.f32.mrb[0].mxu0
  %1413 = vmatprep.mubr.f32.mxu0 0.0
  %1414 = vmatmul.mubr.f32.gmra.mrb[0].mxu0 %v1254
  %v1415 = vpop.f32.mrb[0].mxu0
  %v1416 = vadd.f32 %v1277, %v1415
  %v1417 = vpop.f32.mrb[0].mxu0
  %1418 = vmatprep.mubr.f32.mxu0 0.0
  %1419 = vmatmul.mubr.f32.gmra.mrb[0].mxu0 %v1255
  %v1420 = vpop.f32.mrb[0].mxu0
  %v1421 = vadd.f32 %v1277, %v1420
  %v1422 = vpop.f32.mrb[0].mxu0
  %1423 = vdwg.mxu0
  %v1424 = vmax.f32 %v1346, 0.0
  %v1425 = vmax.f32 %v1351, 0.0
  %v1426 = vmax.f32 %v1356, 0.0
  %v1427 = vmax.f32 %v1361, 0.0
  %v1428 = vmax.f32 %v1366, 0.0
  %v1429 = vmax.f32 %v1371, 0.0
  %v1430 = vmax.f32 %v1376, 0.0
  %v1431 = vmax.f32 %v1381, 0.0
  %v1432 = vmax.f32 %v1386, 0.0
  %v1433 = vmax.f32 %v1391, 0.0
  %v1434 = vmax.f32 %v1396, 0.0
  %v1435 = vmax.f32 %v1401, 0.0
  %v1436 = vmax.f32 %v1406, 0.0
  %v1437 = vmax.f32 %v1411, 0.0
  %v1438 = vmax.f32 %v1416, 0.0
  %v1439 = vmax.f32 %v1421, 0.0
  %v1440 = vld [vmem:[%s7] sm:$0xff]
  %v1441 = vld [vmem:[%s7 + $0x8] sm:$0xff]
  %v1442 = vld [vmem:[%s7 + $0x10] sm:$0xff]
  %v1443 = vld [vmem:[%s7 + $0x18] sm:$0xff]
  %v1444 = vld [vmem:[%s7 + $0x20] sm:$0xff]
  %v1445 = vld [vmem:[%s7 + $0x28] sm:$0xff]
  %v1446 = vld [vmem:[%s7 + $0x30] sm:$0xff]
  %v1447 = vld [vmem:[%s7 + $0x38] sm:$0xff]
  %v1448 = vld [vmem:[%s8] sm:$0x1]
  %v1450 = vlaneseq
  %v1451 = vshrl.u32 %v1450, 7
  %v1452 = vsub.s32 0, %v1451
  %v1453 = vrot.slane %v1448, %v1452
  %vm1455 = vcmask 523264
  %v1457 = vsel %vm1455, %v1424, 0
  %v1460 = vsel %vm1455, %v1425, 0
  %v1463 = vsel %vm1455, %v1426, 0
  %v1466 = vsel %vm1455, %v1427, 0
  %v1469 = vsel %vm1455, %v1428, 0
  %v1472 = vsel %vm1455, %v1429, 0
  %v1475 = vsel %vm1455, %v1430, 0
  %v1478 = vsel %vm1455, %v1431, 0
  %v1481 = vsel %vm1455, %v1432, 0
  %v1484 = vsel %vm1455, %v1433, 0
  %v1487 = vsel %vm1455, %v1434, 0
  %v1490 = vsel %vm1455, %v1435, 0
  %v1493 = vsel %vm1455, %v1436, 0
  %v1496 = vsel %vm1455, %v1437, 0
  %v1499 = vsel %vm1455, %v1438, 0
  %v1502 = vsel %vm1455, %v1439, 0
  %1504 = vmatprep.subr.mxu0 0.0
  %1505 = vmatpush1.msra.mxu0 %v1440
  %1506 = vmatprep.subr.mxu0 0.0
  %1507 = vmatpush1.msra.mxu0 %v1441
  %1508 = vmatprep.subr.mxu0 0.0
  %1509 = vmatpush1.msra.mxu0 %v1442
  %1510 = vmatprep.subr.mxu0 0.0
  %1511 = vmatpush1.msra.mxu0 %v1443
  %1512 = vmatprep.subr.mxu0 0.0
  %1513 = vmatpush1.msra.mxu0 %v1444
  %1514 = vmatprep.subr.mxu0 0.0
  %1515 = vmatpush1.msra.mxu0 %v1445
  %1516 = vmatprep.subr.mxu0 0.0
  %1517 = vmatpush1.msra.mxu0 %v1446
  %1518 = vmatprep.subr.mxu0 0.0
  %1519 = vmatpush1.msra.mxu0 %v1447
  %1520 = vmatprep.subr.mxu0 0.0
  %1521 = vmatpush1.msra.mxu0 0.0
  %1522 = vmatprep.subr.mxu0 0.0
  %1523 = vmatpush1.msra.mxu0 0.0
  %1524 = vmatprep.subr.mxu0 0.0
  %1525 = vmatpush1.msra.mxu0 0.0
  %1526 = vmatprep.subr.mxu0 0.0
  %1527 = vmatpush1.msra.mxu0 0.0
  %1528 = vmatprep.subr.mxu0 0.0
  %1529 = vmatpush1.msra.mxu0 0.0
  %1530 = vmatprep.subr.mxu0 0.0
  %1531 = vmatpush1.msra.mxu0 0.0
  %1532 = vmatprep.subr.mxu0 0.0
  %1533 = vmatpush1.msra.mxu0 0.0
  %1534 = vmatprep.subr.mxu0 0.0
  %1535 = vmatpush1.msra.mxu0 0.0
  %1536 = vmatprep.subr.mxu0 0.0
  %1537 = vmatpush1.msra.mxu0 0.0
  %1538 = vmatprep.subr.mxu0 0.0
  %1539 = vmatpush1.msra.mxu0 0.0
  %1540 = vmatprep.subr.mxu0 0.0
  %1541 = vmatpush1.msra.mxu0 0.0
  %1542 = vmatprep.subr.mxu0 0.0
  %1543 = vmatpush1.msra.mxu0 0.0
  %1544 = vmatprep.subr.mxu0 0.0
  %1545 = vmatpush1.msra.mxu0 0.0
  %1546 = vmatprep.subr.mxu0 0.0
  %1547 = vmatpush1.msra.mxu0 0.0
  %1548 = vmatprep.subr.mxu0 0.0
  %1549 = vmatpush1.msra.mxu0 0.0
  %1550 = vmatprep.subr.mxu0 0.0
  %1551 = vmatpush1.msra.mxu0 0.0
  %1552 = vmatprep.subr.mxu0 0.0
  %1553 = vmatpush1.msra.mxu0 0.0
  %1554 = vmatprep.subr.mxu0 0.0
  %1555 = vmatpush1.msra.mxu0 0.0
  %1556 = vmatprep.subr.mxu0 0.0
  %1557 = vmatpush1.msra.mxu0 0.0
  %1558 = vmatprep.subr.mxu0 0.0
  %1559 = vmatpush1.msra.mxu0 0.0
  %1560 = vmatprep.subr.mxu0 0.0
  %1561 = vmatpush1.msra.mxu0 0.0
  %1562 = vmatprep.subr.mxu0 0.0
  %1563 = vmatpush1.msra.mxu0 0.0
  %1564 = vmatprep.subr.mxu0 0.0
  %1565 = vmatpush1.msra.mxu0 0.0
  %1566 = vmatprep.subr.mxu0 0.0
  %1567 = vmatpush1.msra.mxu0 0.0
  %1568 = vmatprep.mubr.f32.mxu0 0.0
  %1569 = vmatmul.mubr.f32.gmra.mrb[0].mxu0 %v1457
  %v1570 = vpop.f32.mrb[0].mxu0
  %v1571 = vadd.f32 %v1453, %v1570
  %v1572 = vpop.f32.mrb[0].mxu0
  %1573 = vmatprep.mubr.f32.mxu0 0.0
  %1574 = vmatmul.mubr.f32.gmra.mrb[0].mxu0 %v1460
  %v1575 = vpop.f32.mrb[0].mxu0
  %v1576 = vadd.f32 %v1453, %v1575
  %v1577 = vpop.f32.mrb[0].mxu0
  %1578 = vmatprep.mubr.f32.mxu0 0.0
  %1579 = vmatmul.mubr.f32.gmra.mrb[0].mxu0 %v1463
  %v1580 = vpop.f32.mrb[0].mxu0
  %v1581 = vadd.f32 %v1453, %v1580
  %v1582 = vpop.f32.mrb[0].mxu0
  %1583 = vmatprep.mubr.f32.mxu0 0.0
  %1584 = vmatmul.mubr.f32.gmra.mrb[0].mxu0 %v1466
  %v1585 = vpop.f32.mrb[0].mxu0
  %v1586 = vadd.f32 %v1453, %v1585
  %v1587 = vpop.f32.mrb[0].mxu0
  %1588 = vmatprep.mubr.f32.mxu0 0.0
  %1589 = vmatmul.mubr.f32.gmra.mrb[0].mxu0 %v1469
  %v1590 = vpop.f32.mrb[0].mxu0
  %v1591 = vadd.f32 %v1453, %v1590
  %v1592 = vpop.f32.mrb[0].mxu0
  %1593 = vmatprep.mubr.f32.mxu0 0.0
  %1594 = vmatmul.mubr.f32.gmra.mrb[0].mxu0 %v1472
  %v1595 = vpop.f32.mrb[0].mxu0
  %v1596 = vadd.f32 %v1453, %v1595
  %v1597 = vpop.f32.mrb[0].mxu0
  %1598 = vmatprep.mubr.f32.mxu0 0.0
  %1599 = vmatmul.mubr.f32.gmra.mrb[0].mxu0 %v1475
  %v1600 = vpop.f32.mrb[0].mxu0
  %v1601 = vadd.f32 %v1453, %v1600
  %v1602 = vpop.f32.mrb[0].mxu0
  %1603 = vmatprep.mubr.f32.mxu0 0.0
  %1604 = vmatmul.mubr.f32.gmra.mrb[0].mxu0 %v1478
  %v1605 = vpop.f32.mrb[0].mxu0
  %v1606 = vadd.f32 %v1453, %v1605
  %v1607 = vpop.f32.mrb[0].mxu0
  %1608 = vmatprep.mubr.f32.mxu0 0.0
  %1609 = vmatmul.mubr.f32.gmra.mrb[0].mxu0 %v1481
  %v1610 = vpop.f32.mrb[0].mxu0
  %v1611 = vadd.f32 %v1453, %v1610
  %v1612 = vpop.f32.mrb[0].mxu0
  %1613 = vmatprep.mubr.f32.mxu0 0.0
  %1614 = vmatmul.mubr.f32.gmra.mrb[0].mxu0 %v1484
  %v1615 = vpop.f32.mrb[0].mxu0
  %v1616 = vadd.f32 %v1453, %v1615
  %v1617 = vpop.f32.mrb[0].mxu0
  %1618 = vmatprep.mubr.f32.mxu0 0.0
  %1619 = vmatmul.mubr.f32.gmra.mrb[0].mxu0 %v1487
  %v1620 = vpop.f32.mrb[0].mxu0
  %v1621 = vadd.f32 %v1453, %v1620
  %v1622 = vpop.f32.mrb[0].mxu0
  %1623 = vmatprep.mubr.f32.mxu0 0.0
  %1624 = vmatmul.mubr.f32.gmra.mrb[0].mxu0 %v1490
  %v1625 = vpop.f32.mrb[0].mxu0
  %v1626 = vadd.f32 %v1453, %v1625
  %v1627 = vpop.f32.mrb[0].mxu0
  %1628 = vmatprep.mubr.f32.mxu0 0.0
  %1629 = vmatmul.mubr.f32.gmra.mrb[0].mxu0 %v1493
  %v1630 = vpop.f32.mrb[0].mxu0
  %v1631 = vadd.f32 %v1453, %v1630
  %v1632 = vpop.f32.mrb[0].mxu0
  %1633 = vmatprep.mubr.f32.mxu0 0.0
  %1634 = vmatmul.mubr.f32.gmra.mrb[0].mxu0 %v1496
  %v1635 = vpop.f32.mrb[0].mxu0
  %v1636 = vadd.f32 %v1453, %v1635
  %v1637 = vpop.f32.mrb[0].mxu0
  %1638 = vmatprep.mubr.f32.mxu0 0.0
  %1639 = vmatmul.mubr.f32.gmra.mrb[0].mxu0 %v1499
  %v1640 = vpop.f32.mrb[0].mxu0
  %v1641 = vadd.f32 %v1453, %v1640
  %v1642 = vpop.f32.mrb[0].mxu0
  %1643 = vmatprep.mubr.f32.mxu0 0.0
  %1644 = vmatmul.mubr.f32.gmra.mrb[0].mxu0 %v1502
  %v1645 = vpop.f32.mrb[0].mxu0
  %v1646 = vadd.f32 %v1453, %v1645
  %v1647 = vpop.f32.mrb[0].mxu0
  %1648 = vdwg.mxu0
  %1649 = vst [vmem:[%s9] sm:$0xff] %v1571
  %1650 = vst [vmem:[%s9 + $0x8] sm:$0xff] %v1576
  %1651 = vst [vmem:[%s9 + $0x10] sm:$0xff] %v1581
  %1652 = vst [vmem:[%s9 + $0x18] sm:$0xff] %v1586
  %1653 = vst [vmem:[%s9 + $0x20] sm:$0xff] %v1591
  %1654 = vst [vmem:[%s9 + $0x28] sm:$0xff] %v1596
  %1655 = vst [vmem:[%s9 + $0x30] sm:$0xff] %v1601
  %1656 = vst [vmem:[%s9 + $0x38] sm:$0xff] %v1606
  %1657 = vst [vmem:[%s9 + $0x40] sm:$0xff] %v1611
  %1658 = vst [vmem:[%s9 + $0x48] sm:$0xff] %v1616
  %1659 = vst [vmem:[%s9 + $0x50] sm:$0xff] %v1621
  %1660 = vst [vmem:[%s9 + $0x58] sm:$0xff] %v1626
  %1661 = vst [vmem:[%s9 + $0x60] sm:$0xff] %v1631
  %1662 = vst [vmem:[%s9 + $0x68] sm:$0xff] %v1636
  %1663 = vst [vmem:[%s9 + $0x70] sm:$0xff] %v1641
  %1664 = vst [vmem:[%s9 + $0x78] sm:$0xff] %v1646
  // Predicated region
  $region38: #{fully_connected_mnist_forward.1} parent=0 // pred_check
    _
  $region39: #{fully_connected_mnist_forward.1} parent=0 // pred_check_branch
    %1666 = sbr.rel (0) target = $region41
  $region40: #{fully_connected_mnist_forward.1} parent=0 // pred_region
    _
  $region41: #{fully_connected_mnist_forward.1} parent=0 // pred_fallthru
    _
  // Predicated region
  $region42: #{fully_connected_mnist_forward.1} parent=0 // pred_check
    _
  $region43: #{fully_connected_mnist_forward.1} parent=0 // pred_check_branch
    %1668 = sbr.rel (0) target = $region45
  $region44: #{fully_connected_mnist_forward.1} parent=0 // pred_region
    _
  $region45: #{fully_connected_mnist_forward.1} parent=0 // pred_fallthru
    _

</llo_original>
